<compile_context>
chip_gen: v7x
topology: tpu7x:2x2x1
jax: 0.10.0
libtpu: 0.0.40
codegen_flags: <defaults>
</compile_context>

<pallas_src>
import functools

import jax
import jax.numpy as jnp
from jax import lax
from jax.experimental import pallas as pl
from jax.experimental.pallas import tpu as pltpu


# ------------------------------ Pallas kernel ------------------------------

def _bottleneck_kernel(x_ref, masks_ref,
                       w1_ref, w2_ref, w3_ref, w4_ref, w5_ref,
                       b1_ref, b2_ref, b3_ref, b4_ref, b5_ref,
                       o_ref, *, shift_w, shift_h, shift_d):
    """Fused Bottleneck3D forward for one block of G whole samples.

    x_ref    : [Cin, GM]   GM = G*D*H*W, row-major over (g, d, h, w) on lanes
    masks_ref: [6, GM]     f32 boundary masks: (W lo, W hi, H lo, H hi, D lo, D hi)
    w1_ref   : [P, Cin]    bf16, BN1 scale folded
    w{2,3,4} : [P, 3P]     bf16, taps concatenated along K, BN scale folded
    w5_ref   : [Cout, P]   bf16, BN5 scale folded
    b*_ref   : [C, 1]      f32 folded BN biases
    o_ref    : [Cout, GM]
    """
    f32, bf16 = jnp.float32, jnp.bfloat16
    x = x_ref[...].astype(f32)                       # [Cin, GM]
    GM = x.shape[1]
    masks = masks_ref[...]                           # [6, GM] f32, VMEM-resident

    def axial_conv(a, shift, m_lo, m_hi, w_ref, b_ref):
        """3-tap conv (pad=1) along one spatial axis, one [P,3P] MXU matmul."""
        # Taps formed by lane rotation (XLU slot); boundary taps zeroed by the
        # precomputed per-axis masks (this also kills cross-sample wraps).
        a_m = pltpu.roll(a, shift, axis=1) * m_lo        # value at coord-1
        a_p = pltpu.roll(a, GM - shift, axis=1) * m_hi   # value at coord+1
        a_cat = jnp.concatenate([a_m, a, a_p], axis=0).astype(bf16)  # [3P, GM]
        y = jnp.dot(w_ref[...], a_cat, preferred_element_type=f32)
        return y + b_ref[...]

    # conv1 (1x1x1) + bn1 + relu
    out1 = jnp.maximum(
        jnp.dot(w1_ref[...], x.astype(bf16), preferred_element_type=f32)
        + b1_ref[...], 0.0)
    # conv2 (1,1,3) along W + bn2
    out2 = axial_conv(out1, shift_w, masks[0:1], masks[1:2], w2_ref, b2_ref)
    # conv3 (1,3,1) along H on relu(out2) + bn3, then + out2
    out3 = axial_conv(jnp.maximum(out2, 0.0), shift_h, masks[2:3], masks[3:4],
                      w3_ref, b3_ref) + out2
    # conv4 (3,1,1) along D on relu(out3) + bn4, then + out2 + out3, then relu
    out4 = jnp.maximum(
        axial_conv(jnp.maximum(out3, 0.0), shift_d, masks[4:5], masks[5:6],
                   w4_ref, b4_ref) + out2 + out3, 0.0)
    # conv5 (1x1x1) + bn5 + residual(x) + relu
    out5 = jnp.dot(w5_ref[...], out4.astype(bf16),
                   preferred_element_type=f32) + b5_ref[...]
    o_ref[...] = jnp.maximum(out5 + x, 0.0).astype(o_ref.dtype)


# --------------------------------- wrapper ---------------------------------

def _pick_samples_per_block(N, M, Cin, Cout, P,
                            budget_bytes=16 * 1024 * 1024):
    """Samples per grid step: biggest block within a VMEM budget, but keep
    >= 2 'parallel' steps when N >= 2 so both v7x TensorCores are fed."""
    per_sample = 4 * M * (2 * Cin + 2 * Cout + 14 * P + 6)   # rough f32 estimate
    G = max(1, budget_bytes // max(per_sample, 1))
    G = min(G, N)
    if N >= 2:
        G = min(G, max(1, N // 2))
    while N % G:          # whole samples per block
        G -= 1
    if M % 128 != 0:      # keep the lane dim full-extent if M isn't 128-aligned
        G = N
    return G


def bottleneck3d_forward(x_ncdhw, p):
    """Forward pass of Bottleneck3D with stride=1, downsample=None.

    x_ncdhw: [N, inplanes, D, H, W]; inplanes must equal planes*expansion.
    """
    N, Cin, D, H, W = x_ncdhw.shape
    P = p["w1"].shape[1]
    Cout = p["w5"].shape[1]
    assert Cout == Cin, "identity residual requires inplanes == planes*expansion"
    M = D * H * W

    # ---- fold BN scale into conv weights; cast weights to bf16 for the MXU.
    def fold_pw(w_io, s, b):                       # 1x1x1 conv, [in, out]
        w = (w_io.T * s.reshape(-1, 1)).astype(jnp.bfloat16)
        return w, b.reshape(-1, 1).astype(jnp.float32)

    def fold_axial(w_tio, s, b):                   # 3-tap conv, [tap, in, out]
        w_toi = jnp.transpose(w_tio, (0, 2, 1))    # [tap, out, in]
        w_cat = jnp.concatenate([w_toi[0], w_toi[1], w_toi[2]], axis=1)  # [out, 3*in]
        w_cat = (w_cat * s.reshape(-1, 1)).astype(jnp.bfloat16)
        return w_cat, b.reshape(-1, 1).astype(jnp.float32)

    w1k, b1k = fold_pw(p["w1"], p["s1"][0], p["b1"][0])        # [P, Cin]
    w2k, b2k = fold_axial(p["w2"], p["s2"][0], p["b2"][0])     # [P, 3P]
    w3k, b3k = fold_axial(p["w3"], p["s3"][0], p["b3"][0])
    w4k, b4k = fold_axial(p["w4"], p["s4"][0], p["b4"][0])
    w5k, b5k = fold_pw(p["w5"], p["s5"][0], p["b5"][0])        # [Cout, P]

    # ---- fold batch into the lane axis: [Cin, N*M] (one XLA transpose each way).
    G = _pick_samples_per_block(N, M, Cin, Cout, P)
    GM = G * M
    x_flat = jnp.transpose(x_ncdhw.reshape(N, Cin, M), (1, 0, 2)).reshape(Cin, N * M)

    # ---- precompute boundary masks once (no in-kernel iota / div / mod).
    lane = jnp.arange(M, dtype=jnp.int32)
    w_idx = lane % W
    h_idx = (lane // W) % H
    d_idx = lane // (W * H)
    masks1 = jnp.stack([w_idx >= 1, w_idx <= W - 2,
                        h_idx >= 1, h_idx <= H - 2,
                        d_idx >= 1, d_idx <= D - 2], axis=0).astype(jnp.float32)
    masks = jnp.tile(masks1, (1, G))                           # [6, GM]

    def full(shape):
        return pl.BlockSpec(shape, lambda i: (0,) * len(shape))

    kernel = functools.partial(_bottleneck_kernel,
                               shift_w=1, shift_h=W, shift_d=W * H)

    out_flat = pl.pallas_call(
        kernel,
        out_shape=jax.ShapeDtypeStruct((Cout, N * M), x_ncdhw.dtype),
        grid=(N // G,),
        in_specs=[
            pl.BlockSpec((Cin, GM), lambda i: (0, i)),
            pl.BlockSpec((6, GM), lambda i: (0, 0)),
            full(w1k.shape), full(w2k.shape), full(w3k.shape),
            full(w4k.shape), full(w5k.shape),
            full(b1k.shape), full(b2k.shape), full(b3k.shape),
            full(b4k.shape), full(b5k.shape),
        ],
        out_specs=pl.BlockSpec((Cout, GM), lambda i: (0, i)),
        compiler_params=pltpu.CompilerParams(
            dimension_semantics=("parallel",),
            vmem_limit_bytes=32 * 1024 * 1024),
    )(x_flat, masks, w1k, w2k, w3k, w4k, w5k, b1k, b2k, b3k, b4k, b5k)

    out = jnp.transpose(out_flat.reshape(Cout, N, M), (1, 0, 2))
    return out.reshape(N, Cout, D, H, W)


# --------------------------- pure-JAX reference ----------------------------

def _conv3d_ref(x, w, padding):
    return lax.conv_general_dilated(
        x, w, window_strides=(1, 1, 1), padding=padding,
        dimension_numbers=("NCDHW", "OIDHW", "NCDHW"))


def ref_forward(x, p):
    bn = lambda y, s, b: y * s.reshape(1, -1, 1, 1, 1) + b.reshape(1, -1, 1, 1, 1)
    pad0 = ((0, 0), (0, 0), (0, 0))
    padW = ((0, 0), (0, 0), (1, 1))
    padH = ((0, 0), (1, 1), (0, 0))
    padD = ((1, 1), (0, 0), (0, 0))

    w1t = p["w1"].T[:, :, None, None, None]
    w2t = jnp.transpose(p["w2"], (2, 1, 0))[:, :, None, None, :]
    w3t = jnp.transpose(p["w3"], (2, 1, 0))[:, :, None, :, None]
    w4t = jnp.transpose(p["w4"], (2, 1, 0))[:, :, :, None, None]
    w5t = p["w5"].T[:, :, None, None, None]

    out1 = jax.nn.relu(bn(_conv3d_ref(x, w1t, pad0), p["s1"], p["b1"]))
    out2 = bn(_conv3d_ref(out1, w2t, padW), p["s2"], p["b2"])
    out3 = bn(_conv3d_ref(jax.nn.relu(out2), w3t, padH), p["s3"], p["b3"]) + out2
    out4 = bn(_conv3d_ref(jax.nn.relu(out3), w4t, padD), p["s4"], p["b4"]) + out2 + out3
    out5 = bn(_conv3d_ref(jax.nn.relu(out4), w5t, pad0), p["s5"], p["b5"])
    return jax.nn.relu(out5 + x)


# --------------------------------- main ------------------------------------

def _make_params(key, inplanes, planes):
    ks = list(jax.random.split(key, 32))
    pop = lambda: ks.pop()

    def bn_fold(c):
        gamma = jax.random.uniform(pop(), (c,), jnp.float32, 0.5, 1.5)
        beta = 0.1 * jax.random.normal(pop(), (c,), jnp.float32)
        mean = 0.1 * jax.random.normal(pop(), (c,), jnp.float32)
        var = jax.random.uniform(pop(), (c,), jnp.float32, 0.5, 1.5)
        scale = gamma / jnp.sqrt(var + 1e-5)
        bias = beta - mean * scale
        return scale.reshape(1, c), bias.reshape(1, c)

    P, E = planes, 4
    p = {}
    p["w1"] = 0.1 * jax.random.normal(pop(), (inplanes, P), jnp.float32)
    p["w2"] = 0.1 * jax.random.normal(pop(), (3, P, P), jnp.float32)
    p["w3"] = 0.1 * jax.random.normal(pop(), (3, P, P), jnp.float32)
    p["w4"] = 0.1 * jax.random.normal(pop(), (3, P, P), jnp.float32)
    p["w5"] = 0.1 * jax.random.normal(pop(), (P, P * E), jnp.float32)
    p["s1"], p["b1"] = bn_fold(P)
    p["s2"], p["b2"] = bn_fold(P)
    p["s3"], p["b3"] = bn_fold(P)
    p["s4"], p["b4"] = bn_fold(P)
    p["s5"], p["b5"] = bn_fold(P * E)
    return p


if __name__ == "__main__":
    key = jax.random.PRNGKey(0)
    k_x, k_p = jax.random.split(key)

    # planes multiple of 8 (sublane-aligned intermediates); inplanes = planes*4.
    inplanes, planes = 32, 8
    N, D, H, W = 2, 8, 8, 8
    x = jax.random.normal(k_x, (N, inplanes, D, H, W), jnp.float32)

    params = _make_params(k_p, inplanes, planes)

    out = bottleneck3d_forward(x, params)
    out = jax.block_until_ready(out)

    ref = ref_forward(x, params)
    assert out.shape == (N, inplanes, D, H, W)
    # bf16 matmul inputs (f32 accumulation) -> looser tolerance than pure f32.
    err = float(jnp.max(jnp.abs(out - ref)))
    assert jnp.allclose(out, ref, rtol=3e-2, atol=3e-2), err

    print("KERNEL_OK")
</pallas_src>

<mosaic_0001>
module attributes {stable_mosaic.version = 11 : i64} {
  func.func @_bottleneck_kernel(%arg0: i32, %arg1: memref<32x512xf32, #tpu.memory_space<vmem>>, %arg2: memref<6x512xf32, #tpu.memory_space<vmem>>, %arg3: memref<8x32xbf16, #tpu.memory_space<vmem>>, %arg4: memref<8x24xbf16, #tpu.memory_space<vmem>>, %arg5: memref<8x24xbf16, #tpu.memory_space<vmem>>, %arg6: memref<8x24xbf16, #tpu.memory_space<vmem>>, %arg7: memref<32x8xbf16, #tpu.memory_space<vmem>>, %arg8: memref<8x1xf32, #tpu.memory_space<vmem>>, %arg9: memref<8x1xf32, #tpu.memory_space<vmem>>, %arg10: memref<8x1xf32, #tpu.memory_space<vmem>>, %arg11: memref<8x1xf32, #tpu.memory_space<vmem>>, %arg12: memref<32x1xf32, #tpu.memory_space<vmem>>, %arg13: memref<32x512xf32, #tpu.memory_space<vmem>>) attributes {dimension_semantics = [#tpu.dimension_semantics<parallel>], iteration_bounds = array<i64: 2>, scalar_prefetch = 0 : i64, scratch_operands = 0 : i64, tpu.core_type = #tpu.core_type<tc>, window_params = [{transform_indices = @transform_0, window_bounds = array<i64: 32, 512>}, {pipeline_mode = #tpu.pipeline_mode<synchronous>, transform_indices = @transform_1, window_bounds = array<i64: 6, 512>}, {pipeline_mode = #tpu.pipeline_mode<synchronous>, transform_indices = @transform_2, window_bounds = array<i64: 8, 32>}, {pipeline_mode = #tpu.pipeline_mode<synchronous>, transform_indices = @transform_3, window_bounds = array<i64: 8, 24>}, {pipeline_mode = #tpu.pipeline_mode<synchronous>, transform_indices = @transform_4, window_bounds = array<i64: 8, 24>}, {pipeline_mode = #tpu.pipeline_mode<synchronous>, transform_indices = @transform_5, window_bounds = array<i64: 8, 24>}, {pipeline_mode = #tpu.pipeline_mode<synchronous>, transform_indices = @transform_6, window_bounds = array<i64: 32, 8>}, {pipeline_mode = #tpu.pipeline_mode<synchronous>, transform_indices = @transform_7, window_bounds = array<i64: 8, 1>}, {pipeline_mode = #tpu.pipeline_mode<synchronous>, transform_indices = @transform_8, window_bounds = array<i64: 8, 1>}, {pipeline_mode = #tpu.pipeline_mode<synchronous>, transform_indices = @transform_9, window_bounds = array<i64: 8, 1>}, {pipeline_mode = #tpu.pipeline_mode<synchronous>, transform_indices = @transform_10, window_bounds = array<i64: 8, 1>}, {pipeline_mode = #tpu.pipeline_mode<synchronous>, transform_indices = @transform_11, window_bounds = array<i64: 32, 1>}, {transform_indices = @transform_12, window_bounds = array<i64: 32, 512>}]} {
    %c0 = arith.constant 0 : index
    %c0_0 = arith.constant 0 : index
    %0 = vector.load %arg1[%c0, %c0_0] : memref<32x512xf32, #tpu.memory_space<vmem>>, vector<32x512xf32>
    %c0_1 = arith.constant 0 : index
    %c0_2 = arith.constant 0 : index
    %1 = vector.load %arg2[%c0_1, %c0_2] : memref<6x512xf32, #tpu.memory_space<vmem>>, vector<6x512xf32>
    %c0_3 = arith.constant 0 : index
    %c0_4 = arith.constant 0 : index
    %2 = vector.load %arg3[%c0_3, %c0_4] : memref<8x32xbf16, #tpu.memory_space<vmem>>, vector<8x32xbf16>
    %3 = arith.truncf %0 : vector<32x512xf32> to vector<32x512xbf16>
    %cst = arith.constant dense<0.000000e+00> : vector<8x512xf32>
    %4 = tpu.matmul %2, %3, %cst {dimension_numbers = #tpu.dot_dimension_numbers<[1], [0], [0], [1], [0, 0, 1, 1], [], []>} : vector<8x32xbf16>, vector<32x512xbf16>, vector<8x512xf32> -> vector<8x512xf32>
    %c0_5 = arith.constant 0 : index
    %c0_6 = arith.constant 0 : index
    %5 = vector.load %arg8[%c0_5, %c0_6] : memref<8x1xf32, #tpu.memory_space<vmem>>, vector<8x1xf32>
    %6 = vector.broadcast %5 : vector<8x1xf32> to vector<8x512xf32>
    %7 = arith.addf %4, %6 : vector<8x512xf32>
    %cst_7 = arith.constant 0.000000e+00 : f32
    %8 = vector.broadcast %cst_7 : f32 to vector<8x512xf32>
    %9 = arith.maximumf %7, %8 : vector<8x512xf32>
    %10 = vector.extract_strided_slice %1 {offsets = [0, 0], sizes = [1, 512], strides = [1, 1]} : vector<6x512xf32> to vector<1x512xf32>
    %11 = vector.extract_strided_slice %1 {offsets = [1, 0], sizes = [1, 512], strides = [1, 1]} : vector<6x512xf32> to vector<1x512xf32>
    %c1_i32 = arith.constant 1 : i32
    %12 = tpu.dynamic_rotate %9 by %c1_i32 dim 1 : vector<8x512xf32>, i32 -> vector<8x512xf32>
    %13 = vector.broadcast %10 : vector<1x512xf32> to vector<8x512xf32>
    %14 = arith.mulf %12, %13 : vector<8x512xf32>
    %c511_i32 = arith.constant 511 : i32
    %15 = tpu.dynamic_rotate %9 by %c511_i32 dim 1 : vector<8x512xf32>, i32 -> vector<8x512xf32>
    %16 = vector.broadcast %11 : vector<1x512xf32> to vector<8x512xf32>
    %17 = arith.mulf %15, %16 : vector<8x512xf32>
    %18 = tpu.concatenate %14, %9, %17 in 0 : vector<8x512xf32>, vector<8x512xf32>, vector<8x512xf32> -> vector<24x512xf32>
    %19 = arith.truncf %18 : vector<24x512xf32> to vector<24x512xbf16>
    %c0_8 = arith.constant 0 : index
    %c0_9 = arith.constant 0 : index
    %20 = vector.load %arg4[%c0_8, %c0_9] : memref<8x24xbf16, #tpu.memory_space<vmem>>, vector<8x24xbf16>
    %cst_10 = arith.constant dense<0.000000e+00> : vector<8x512xf32>
    %21 = tpu.matmul %20, %19, %cst_10 {dimension_numbers = #tpu.dot_dimension_numbers<[1], [0], [0], [1], [0, 0, 1, 1], [], []>} : vector<8x24xbf16>, vector<24x512xbf16>, vector<8x512xf32> -> vector<8x512xf32>
    %c0_11 = arith.constant 0 : index
    %c0_12 = arith.constant 0 : index
    %22 = vector.load %arg9[%c0_11, %c0_12] : memref<8x1xf32, #tpu.memory_space<vmem>>, vector<8x1xf32>
    %23 = vector.broadcast %22 : vector<8x1xf32> to vector<8x512xf32>
    %24 = arith.addf %21, %23 : vector<8x512xf32>
    %cst_13 = arith.constant 0.000000e+00 : f32
    %25 = vector.broadcast %cst_13 : f32 to vector<8x512xf32>
    %26 = arith.maximumf %24, %25 : vector<8x512xf32>
    %27 = vector.extract_strided_slice %1 {offsets = [2, 0], sizes = [1, 512], strides = [1, 1]} : vector<6x512xf32> to vector<1x512xf32>
    %28 = vector.extract_strided_slice %1 {offsets = [3, 0], sizes = [1, 512], strides = [1, 1]} : vector<6x512xf32> to vector<1x512xf32>
    %c8_i32 = arith.constant 8 : i32
    %29 = tpu.dynamic_rotate %26 by %c8_i32 dim 1 : vector<8x512xf32>, i32 -> vector<8x512xf32>
    %30 = vector.broadcast %27 : vector<1x512xf32> to vector<8x512xf32>
    %31 = arith.mulf %29, %30 : vector<8x512xf32>
    %c504_i32 = arith.constant 504 : i32
    %32 = tpu.dynamic_rotate %26 by %c504_i32 dim 1 : vector<8x512xf32>, i32 -> vector<8x512xf32>
    %33 = vector.broadcast %28 : vector<1x512xf32> to vector<8x512xf32>
    %34 = arith.mulf %32, %33 : vector<8x512xf32>
    %35 = tpu.concatenate %31, %26, %34 in 0 : vector<8x512xf32>, vector<8x512xf32>, vector<8x512xf32> -> vector<24x512xf32>
    %36 = arith.truncf %35 : vector<24x512xf32> to vector<24x512xbf16>
    %c0_14 = arith.constant 0 : index
    %c0_15 = arith.constant 0 : index
    %37 = vector.load %arg5[%c0_14, %c0_15] : memref<8x24xbf16, #tpu.memory_space<vmem>>, vector<8x24xbf16>
    %cst_16 = arith.constant dense<0.000000e+00> : vector<8x512xf32>
    %38 = tpu.matmul %37, %36, %cst_16 {dimension_numbers = #tpu.dot_dimension_numbers<[1], [0], [0], [1], [0, 0, 1, 1], [], []>} : vector<8x24xbf16>, vector<24x512xbf16>, vector<8x512xf32> -> vector<8x512xf32>
    %c0_17 = arith.constant 0 : index
    %c0_18 = arith.constant 0 : index
    %39 = vector.load %arg10[%c0_17, %c0_18] : memref<8x1xf32, #tpu.memory_space<vmem>>, vector<8x1xf32>
    %40 = vector.broadcast %39 : vector<8x1xf32> to vector<8x512xf32>
    %41 = arith.addf %38, %40 : vector<8x512xf32>
    %42 = arith.addf %41, %24 : vector<8x512xf32>
    %cst_19 = arith.constant 0.000000e+00 : f32
    %43 = vector.broadcast %cst_19 : f32 to vector<8x512xf32>
    %44 = arith.maximumf %42, %43 : vector<8x512xf32>
    %45 = vector.extract_strided_slice %1 {offsets = [4, 0], sizes = [1, 512], strides = [1, 1]} : vector<6x512xf32> to vector<1x512xf32>
    %46 = vector.extract_strided_slice %1 {offsets = [5, 0], sizes = [1, 512], strides = [1, 1]} : vector<6x512xf32> to vector<1x512xf32>
    %c64_i32 = arith.constant 64 : i32
    %47 = tpu.dynamic_rotate %44 by %c64_i32 dim 1 : vector<8x512xf32>, i32 -> vector<8x512xf32>
    %48 = vector.broadcast %45 : vector<1x512xf32> to vector<8x512xf32>
    %49 = arith.mulf %47, %48 : vector<8x512xf32>
    %c448_i32 = arith.constant 448 : i32
    %50 = tpu.dynamic_rotate %44 by %c448_i32 dim 1 : vector<8x512xf32>, i32 -> vector<8x512xf32>
    %51 = vector.broadcast %46 : vector<1x512xf32> to vector<8x512xf32>
    %52 = arith.mulf %50, %51 : vector<8x512xf32>
    %53 = tpu.concatenate %49, %44, %52 in 0 : vector<8x512xf32>, vector<8x512xf32>, vector<8x512xf32> -> vector<24x512xf32>
    %54 = arith.truncf %53 : vector<24x512xf32> to vector<24x512xbf16>
    %c0_20 = arith.constant 0 : index
    %c0_21 = arith.constant 0 : index
    %55 = vector.load %arg6[%c0_20, %c0_21] : memref<8x24xbf16, #tpu.memory_space<vmem>>, vector<8x24xbf16>
    %cst_22 = arith.constant dense<0.000000e+00> : vector<8x512xf32>
    %56 = tpu.matmul %55, %54, %cst_22 {dimension_numbers = #tpu.dot_dimension_numbers<[1], [0], [0], [1], [0, 0, 1, 1], [], []>} : vector<8x24xbf16>, vector<24x512xbf16>, vector<8x512xf32> -> vector<8x512xf32>
    %c0_23 = arith.constant 0 : index
    %c0_24 = arith.constant 0 : index
    %57 = vector.load %arg11[%c0_23, %c0_24] : memref<8x1xf32, #tpu.memory_space<vmem>>, vector<8x1xf32>
    %58 = vector.broadcast %57 : vector<8x1xf32> to vector<8x512xf32>
    %59 = arith.addf %56, %58 : vector<8x512xf32>
    %60 = arith.addf %59, %24 : vector<8x512xf32>
    %61 = arith.addf %60, %42 : vector<8x512xf32>
    %cst_25 = arith.constant 0.000000e+00 : f32
    %62 = vector.broadcast %cst_25 : f32 to vector<8x512xf32>
    %63 = arith.maximumf %61, %62 : vector<8x512xf32>
    %c0_26 = arith.constant 0 : index
    %c0_27 = arith.constant 0 : index
    %64 = vector.load %arg7[%c0_26, %c0_27] : memref<32x8xbf16, #tpu.memory_space<vmem>>, vector<32x8xbf16>
    %65 = arith.truncf %63 : vector<8x512xf32> to vector<8x512xbf16>
    %cst_28 = arith.constant dense<0.000000e+00> : vector<32x512xf32>
    %66 = tpu.matmul %64, %65, %cst_28 {dimension_numbers = #tpu.dot_dimension_numbers<[1], [0], [0], [1], [0, 0, 1, 1], [], []>} : vector<32x8xbf16>, vector<8x512xbf16>, vector<32x512xf32> -> vector<32x512xf32>
    %c0_29 = arith.constant 0 : index
    %c0_30 = arith.constant 0 : index
    %67 = vector.load %arg12[%c0_29, %c0_30] : memref<32x1xf32, #tpu.memory_space<vmem>>, vector<32x1xf32>
    %68 = vector.broadcast %67 : vector<32x1xf32> to vector<32x512xf32>
    %69 = arith.addf %66, %68 : vector<32x512xf32>
    %70 = arith.addf %69, %0 : vector<32x512xf32>
    %cst_31 = arith.constant 0.000000e+00 : f32
    %71 = vector.broadcast %cst_31 : f32 to vector<32x512xf32>
    %72 = arith.maximumf %70, %71 : vector<32x512xf32>
    %c0_32 = arith.constant 0 : index
    %c0_33 = arith.constant 0 : index
    %73 = vector.load %arg13[%c0_32, %c0_33] : memref<32x512xf32, #tpu.memory_space<vmem>>, vector<32x512xf32>
    tpu.vector_store %arg13[%c0_32, %c0_33], %72 {strides = array<i32>} : memref<32x512xf32, #tpu.memory_space<vmem>>, vector<32x512xf32>,
    return
  }
  func.func @transform_0(%arg0: i32) -> (i32, i32) {
    %c0_i32 = arith.constant 0 : i32
    %c0_i32_0 = arith.constant 0 : i32
    return %c0_i32, %arg0 : i32, i32
  }
  func.func @transform_1(%arg0: i32) -> (i32, i32) {
    %c0_i32 = arith.constant 0 : i32
    %c0_i32_0 = arith.constant 0 : i32
    %c0_i32_1 = arith.constant 0 : i32
    return %c0_i32, %c0_i32_0 : i32, i32
  }
  func.func @transform_2(%arg0: i32) -> (i32, i32) {
    %c0_i32 = arith.constant 0 : i32
    %c0_i32_0 = arith.constant 0 : i32
    %c0_i32_1 = arith.constant 0 : i32
    return %c0_i32, %c0_i32_0 : i32, i32
  }
  func.func @transform_3(%arg0: i32) -> (i32, i32) {
    %c0_i32 = arith.constant 0 : i32
    %c0_i32_0 = arith.constant 0 : i32
    %c0_i32_1 = arith.constant 0 : i32
    return %c0_i32, %c0_i32_0 : i32, i32
  }
  func.func @transform_4(%arg0: i32) -> (i32, i32) {
    %c0_i32 = arith.constant 0 : i32
    %c0_i32_0 = arith.constant 0 : i32
    %c0_i32_1 = arith.constant 0 : i32
    return %c0_i32, %c0_i32_0 : i32, i32
  }
  func.func @transform_5(%arg0: i32) -> (i32, i32) {
    %c0_i32 = arith.constant 0 : i32
    %c0_i32_0 = arith.constant 0 : i32
    %c0_i32_1 = arith.constant 0 : i32
    return %c0_i32, %c0_i32_0 : i32, i32
  }
  func.func @transform_6(%arg0: i32) -> (i32, i32) {
    %c0_i32 = arith.constant 0 : i32
    %c0_i32_0 = arith.constant 0 : i32
    %c0_i32_1 = arith.constant 0 : i32
    return %c0_i32, %c0_i32_0 : i32, i32
  }
  func.func @transform_7(%arg0: i32) -> (i32, i32) {
    %c0_i32 = arith.constant 0 : i32
    %c0_i32_0 = arith.constant 0 : i32
    %c0_i32_1 = arith.constant 0 : i32
    return %c0_i32, %c0_i32_0 : i32, i32
  }
  func.func @transform_8(%arg0: i32) -> (i32, i32) {
    %c0_i32 = arith.constant 0 : i32
    %c0_i32_0 = arith.constant 0 : i32
    %c0_i32_1 = arith.constant 0 : i32
    return %c0_i32, %c0_i32_0 : i32, i32
  }
  func.func @transform_9(%arg0: i32) -> (i32, i32) {
    %c0_i32 = arith.constant 0 : i32
    %c0_i32_0 = arith.constant 0 : i32
    %c0_i32_1 = arith.constant 0 : i32
    return %c0_i32, %c0_i32_0 : i32, i32
  }
  func.func @transform_10(%arg0: i32) -> (i32, i32) {
    %c0_i32 = arith.constant 0 : i32
    %c0_i32_0 = arith.constant 0 : i32
    %c0_i32_1 = arith.constant 0 : i32
    return %c0_i32, %c0_i32_0 : i32, i32
  }
  func.func @transform_11(%arg0: i32) -> (i32, i32) {
    %c0_i32 = arith.constant 0 : i32
    %c0_i32_0 = arith.constant 0 : i32
    %c0_i32_1 = arith.constant 0 : i32
    return %c0_i32, %c0_i32_0 : i32, i32
  }
  func.func @transform_12(%arg0: i32) -> (i32, i32) {
    %c0_i32 = arith.constant 0 : i32
    %c0_i32_0 = arith.constant 0 : i32
    return %c0_i32, %arg0 : i32, i32
  }
}

</mosaic_0001>

<llo_original>
// kernel: tpu_custom_call.1
$region0: #{tpu_custom_call.1}
  #allocation0 [shape = 'u32[]', space=smem, size = 0x4, offset = 0x4, fixed_abs, tag = 'smem constant byte address 0x4 - core index']
  #allocation1 [shape = 'u32[144,128]{1,0:T(1,128)}', space=vmem, size = 0x12000, scoped, tag = 'internal scratch']
  %s0 = inlined_call_operand.hbm [shape: f32[32,1024], index: 0, kind: input, shape index: {}]
  %s1 = inlined_call_operand.vmem [shape: f32[6,512], index: 1, kind: input, shape index: {}]
  %s2 = inlined_call_operand.vmem [shape: bf16[8,32], index: 2, kind: input, shape index: {}]
  %s3 = inlined_call_operand.vmem [shape: bf16[8,24], index: 3, kind: input, shape index: {}]
  %s4 = inlined_call_operand.vmem [shape: bf16[8,24], index: 4, kind: input, shape index: {}]
  %s5 = inlined_call_operand.vmem [shape: bf16[8,24], index: 5, kind: input, shape index: {}]
  %s6 = inlined_call_operand.vmem [shape: bf16[32,8], index: 6, kind: input, shape index: {}]
  %s7 = inlined_call_operand.vmem [shape: f32[8,1], index: 7, kind: input, shape index: {}]
  %s8 = inlined_call_operand.vmem [shape: f32[8,1], index: 8, kind: input, shape index: {}]
  %s9 = inlined_call_operand.vmem [shape: f32[8,1], index: 9, kind: input, shape index: {}]
  %s10 = inlined_call_operand.vmem [shape: f32[8,1], index: 10, kind: input, shape index: {}]
  %s11 = inlined_call_operand.vmem [shape: f32[32,1], index: 11, kind: input, shape index: {}]
  %s12 = inlined_call_operand.hbm [shape: f32[32,1024], index: 12, kind: output, shape index: {}]
  %s13 = sld [smem:[#allocation0]]
  $region85: #{tpu_custom_call.1} parent=0
    _
  %s15 = ssub.s32 1, %s13
  %s16 = scalar_select 0, %s15, %s13
  $region1: #{tpu_custom_call.1} parent=0
    #allocation2 [shape = 'u8[131072]{0}', space=vmem, size = 0x20000, scoped, tag = 'input window, operand 0']
    #allocation3 [shape = 's32[2]{0}', space=sflag, size = 0x8, scoped, tag = 'scoped memory for tpu_custom_call.1']
    #allocation4 [shape = 's32[2]{0}', space=sflag, size = 0x8, scoped, tag = 'scoped memory for tpu_custom_call.1']
    #allocation5 [shape = 'u8[131072]{0}', space=vmem, size = 0x20000, scoped, tag = 'output window, operand 0']
    %17 = vsyncpa [#allocation3], 0
    %s18 = scalar_lea.sflag [#allocation3], 1
    %19 = vsyncpa %s18, 0
    %20 = vsyncpa [#allocation4], 0
    %s21 = scalar_lea.sflag [#allocation4], 1
    %22 = vsyncpa %s21, 0
    loop: start=0, step=1, limit=4
    $region2: #{tpu_custom_call.1} parent=1 // loop_pre_header
      _
    $region3: #{tpu_custom_call.1} parent=1 // loop_header
      %s24 = sphi 0, %s28
      %p25 = scmp.ge.s32.totalorder %s24, 4
      %s34 = sphi 0, %s36
      %s37 = sphi 0, %s34
      %s38 = sphi 0, %s37
      %s54 = sphi 0, %s38
      %s58 = sphi 0, %s58
      %s60 = sphi 0, %s58
      %s61 = sphi 0, %s60
      %s75 = sphi 0, %s61
      %s79 = sphi 0, %s79
      %s81 = sphi 0, %s79
      %s82 = sphi 0, %s81
      %s96 = sphi 0, %s82
      %s100 = sphi 0, %s100
      %s102 = sphi 0, %s100
      %s103 = sphi 0, %s102
      %s117 = sphi 0, %s103
      %s121 = sphi 0, %s121
      %s123 = sphi 0, %s121
      %s124 = sphi 0, %s123
      %s138 = sphi 0, %s124
      %s142 = sphi 0, %s142
      %s144 = sphi 0, %s142
      %s145 = sphi 0, %s144
      %s159 = sphi 0, %s145
      %s163 = sphi 0, %s163
      %s165 = sphi 0, %s163
      %s166 = sphi 0, %s165
      %s180 = sphi 0, %s166
      %s184 = sphi 0, %s184
      %s186 = sphi 0, %s184
      %s187 = sphi 0, %s186
      %s201 = sphi 0, %s187
      %s205 = sphi 0, %s205
      %s207 = sphi 0, %s205
      %s208 = sphi 0, %s207
      %s222 = sphi 0, %s208
      %s226 = sphi 0, %s226
      %s228 = sphi 0, %s226
      %s229 = sphi 0, %s228
      %s243 = sphi 0, %s229
      %s247 = sphi 0, %s247
      %s249 = sphi 0, %s247
      %s250 = sphi 0, %s249
      %s264 = sphi 0, %s250
      %s268 = sphi 0, %s268
      %s270 = sphi 0, %s268
      %s271 = sphi 0, %s270
      %s285 = sphi 0, %s271
      %s291 = sphi 0, %s293
      %s294 = sphi 0, %s291
      %s295 = sphi 0, %s294
      %s311 = sphi 0, %s295
    $region4: #{tpu_custom_call.1} parent=1 // loop_header_branch
      %27 = sbr.rel (%p25) target = $region8
    $region5: #{tpu_custom_call.1} parent=1 // loop_body
      %s29 = ssub.s32 %s24, 1
      %s30 = ssub.s32 %s24, 2
      %s31 = sadd.s32 %s24, 1
      %s32 = ssub.s32 %s24, %s31
      %p33 = scmp.eq.s32.totalorder %s32, 0
      %s35 = sadd.s32 %s34, 1
      %s36 = scalar_select %p33, %s34, %s35
      %p39 = pneg %p33
      %p40 = scmp.eq.s32.totalorder %s24, 1
      %p41 = por %p39, %p40
      %p42 = scmp.ne.s32.totalorder %s34, %s37
      %p43 = scmp.eq.s32.totalorder %s24, 0
      %p44 = por %p42, %p43
      %p45 = scmp.ne.s32.totalorder %s34, %s37
      %p46 = scmp.eq.s32.totalorder %s29, 1
      %p47 = por %p45, %p46
      %p48 = scmp.ne.s32.totalorder %s37, %s38
      %p49 = scmp.eq.s32.totalorder %s29, 0
      %p50 = por %p48, %p49
      %p51 = scmp.ne.s32.totalorder %s37, %s38
      %p52 = scmp.eq.s32.totalorder %s30, 1
      %p53 = por %p51, %p52
      %p55 = scmp.ne.s32.totalorder %s38, %s54
      %p56 = scmp.eq.s32.totalorder %s30, 0
      %p57 = por %p55, %p56
      %s59 = sadd.s32 %s58, 1
      %p62 = scmp.eq.s32.totalorder %s24, 1
      %p63 = scmp.ne.s32.totalorder %s58, %s60
      %p64 = scmp.eq.s32.totalorder %s24, 0
      %p65 = por %p63, %p64
      %p66 = scmp.ne.s32.totalorder %s58, %s60
      %p67 = scmp.eq.s32.totalorder %s29, 1
      %p68 = por %p66, %p67
      %p69 = scmp.ne.s32.totalorder %s60, %s61
      %p70 = scmp.eq.s32.totalorder %s29, 0
      %p71 = por %p69, %p70
      %p72 = scmp.ne.s32.totalorder %s60, %s61
      %p73 = scmp.eq.s32.totalorder %s30, 1
      %p74 = por %p72, %p73
      %p76 = scmp.ne.s32.totalorder %s61, %s75
      %p77 = scmp.eq.s32.totalorder %s30, 0
      %p78 = por %p76, %p77
      %s80 = sadd.s32 %s79, 1
      %p83 = scmp.eq.s32.totalorder %s24, 1
      %p84 = scmp.ne.s32.totalorder %s79, %s81
      %p85 = scmp.eq.s32.totalorder %s24, 0
      %p86 = por %p84, %p85
      %p87 = scmp.ne.s32.totalorder %s79, %s81
      %p88 = scmp.eq.s32.totalorder %s29, 1
      %p89 = por %p87, %p88
      %p90 = scmp.ne.s32.totalorder %s81, %s82
      %p91 = scmp.eq.s32.totalorder %s29, 0
      %p92 = por %p90, %p91
      %p93 = scmp.ne.s32.totalorder %s81, %s82
      %p94 = scmp.eq.s32.totalorder %s30, 1
      %p95 = por %p93, %p94
      %p97 = scmp.ne.s32.totalorder %s82, %s96
      %p98 = scmp.eq.s32.totalorder %s30, 0
      %p99 = por %p97, %p98
      %s101 = sadd.s32 %s100, 1
      %p104 = scmp.eq.s32.totalorder %s24, 1
      %p105 = scmp.ne.s32.totalorder %s100, %s102
      %p106 = scmp.eq.s32.totalorder %s24, 0
      %p107 = por %p105, %p106
      %p108 = scmp.ne.s32.totalorder %s100, %s102
      %p109 = scmp.eq.s32.totalorder %s29, 1
      %p110 = por %p108, %p109
      %p111 = scmp.ne.s32.totalorder %s102, %s103
      %p112 = scmp.eq.s32.totalorder %s29, 0
      %p113 = por %p111, %p112
      %p114 = scmp.ne.s32.totalorder %s102, %s103
      %p115 = scmp.eq.s32.totalorder %s30, 1
      %p116 = por %p114, %p115
      %p118 = scmp.ne.s32.totalorder %s103, %s117
      %p119 = scmp.eq.s32.totalorder %s30, 0
      %p120 = por %p118, %p119
      %s122 = sadd.s32 %s121, 1
      %p125 = scmp.eq.s32.totalorder %s24, 1
      %p126 = scmp.ne.s32.totalorder %s121, %s123
      %p127 = scmp.eq.s32.totalorder %s24, 0
      %p128 = por %p126, %p127
      %p129 = scmp.ne.s32.totalorder %s121, %s123
      %p130 = scmp.eq.s32.totalorder %s29, 1
      %p131 = por %p129, %p130
      %p132 = scmp.ne.s32.totalorder %s123, %s124
      %p133 = scmp.eq.s32.totalorder %s29, 0
      %p134 = por %p132, %p133
      %p135 = scmp.ne.s32.totalorder %s123, %s124
      %p136 = scmp.eq.s32.totalorder %s30, 1
      %p137 = por %p135, %p136
      %p139 = scmp.ne.s32.totalorder %s124, %s138
      %p140 = scmp.eq.s32.totalorder %s30, 0
      %p141 = por %p139, %p140
      %s143 = sadd.s32 %s142, 1
      %p146 = scmp.eq.s32.totalorder %s24, 1
      %p147 = scmp.ne.s32.totalorder %s142, %s144
      %p148 = scmp.eq.s32.totalorder %s24, 0
      %p149 = por %p147, %p148
      %p150 = scmp.ne.s32.totalorder %s142, %s144
      %p151 = scmp.eq.s32.totalorder %s29, 1
      %p152 = por %p150, %p151
      %p153 = scmp.ne.s32.totalorder %s144, %s145
      %p154 = scmp.eq.s32.totalorder %s29, 0
      %p155 = por %p153, %p154
      %p156 = scmp.ne.s32.totalorder %s144, %s145
      %p157 = scmp.eq.s32.totalorder %s30, 1
      %p158 = por %p156, %p157
      %p160 = scmp.ne.s32.totalorder %s145, %s159
      %p161 = scmp.eq.s32.totalorder %s30, 0
      %p162 = por %p160, %p161
      %s164 = sadd.s32 %s163, 1
      %p167 = scmp.eq.s32.totalorder %s24, 1
      %p168 = scmp.ne.s32.totalorder %s163, %s165
      %p169 = scmp.eq.s32.totalorder %s24, 0
      %p170 = por %p168, %p169
      %p171 = scmp.ne.s32.totalorder %s163, %s165
      %p172 = scmp.eq.s32.totalorder %s29, 1
      %p173 = por %p171, %p172
      %p174 = scmp.ne.s32.totalorder %s165, %s166
      %p175 = scmp.eq.s32.totalorder %s29, 0
      %p176 = por %p174, %p175
      %p177 = scmp.ne.s32.totalorder %s165, %s166
      %p178 = scmp.eq.s32.totalorder %s30, 1
      %p179 = por %p177, %p178
      %p181 = scmp.ne.s32.totalorder %s166, %s180
      %p182 = scmp.eq.s32.totalorder %s30, 0
      %p183 = por %p181, %p182
      %s185 = sadd.s32 %s184, 1
      %p188 = scmp.eq.s32.totalorder %s24, 1
      %p189 = scmp.ne.s32.totalorder %s184, %s186
      %p190 = scmp.eq.s32.totalorder %s24, 0
      %p191 = por %p189, %p190
      %p192 = scmp.ne.s32.totalorder %s184, %s186
      %p193 = scmp.eq.s32.totalorder %s29, 1
      %p194 = por %p192, %p193
      %p195 = scmp.ne.s32.totalorder %s186, %s187
      %p196 = scmp.eq.s32.totalorder %s29, 0
      %p197 = por %p195, %p196
      %p198 = scmp.ne.s32.totalorder %s186, %s187
      %p199 = scmp.eq.s32.totalorder %s30, 1
      %p200 = por %p198, %p199
      %p202 = scmp.ne.s32.totalorder %s187, %s201
      %p203 = scmp.eq.s32.totalorder %s30, 0
      %p204 = por %p202, %p203
      %s206 = sadd.s32 %s205, 1
      %p209 = scmp.eq.s32.totalorder %s24, 1
      %p210 = scmp.ne.s32.totalorder %s205, %s207
      %p211 = scmp.eq.s32.totalorder %s24, 0
      %p212 = por %p210, %p211
      %p213 = scmp.ne.s32.totalorder %s205, %s207
      %p214 = scmp.eq.s32.totalorder %s29, 1
      %p215 = por %p213, %p214
      %p216 = scmp.ne.s32.totalorder %s207, %s208
      %p217 = scmp.eq.s32.totalorder %s29, 0
      %p218 = por %p216, %p217
      %p219 = scmp.ne.s32.totalorder %s207, %s208
      %p220 = scmp.eq.s32.totalorder %s30, 1
      %p221 = por %p219, %p220
      %p223 = scmp.ne.s32.totalorder %s208, %s222
      %p224 = scmp.eq.s32.totalorder %s30, 0
      %p225 = por %p223, %p224
      %s227 = sadd.s32 %s226, 1
      %p230 = scmp.eq.s32.totalorder %s24, 1
      %p231 = scmp.ne.s32.totalorder %s226, %s228
      %p232 = scmp.eq.s32.totalorder %s24, 0
      %p233 = por %p231, %p232
      %p234 = scmp.ne.s32.totalorder %s226, %s228
      %p235 = scmp.eq.s32.totalorder %s29, 1
      %p236 = por %p234, %p235
      %p237 = scmp.ne.s32.totalorder %s228, %s229
      %p238 = scmp.eq.s32.totalorder %s29, 0
      %p239 = por %p237, %p238
      %p240 = scmp.ne.s32.totalorder %s228, %s229
      %p241 = scmp.eq.s32.totalorder %s30, 1
      %p242 = por %p240, %p241
      %p244 = scmp.ne.s32.totalorder %s229, %s243
      %p245 = scmp.eq.s32.totalorder %s30, 0
      %p246 = por %p244, %p245
      %s248 = sadd.s32 %s247, 1
      %p251 = scmp.eq.s32.totalorder %s24, 1
      %p252 = scmp.ne.s32.totalorder %s247, %s249
      %p253 = scmp.eq.s32.totalorder %s24, 0
      %p254 = por %p252, %p253
      %p255 = scmp.ne.s32.totalorder %s247, %s249
      %p256 = scmp.eq.s32.totalorder %s29, 1
      %p257 = por %p255, %p256
      %p258 = scmp.ne.s32.totalorder %s249, %s250
      %p259 = scmp.eq.s32.totalorder %s29, 0
      %p260 = por %p258, %p259
      %p261 = scmp.ne.s32.totalorder %s249, %s250
      %p262 = scmp.eq.s32.totalorder %s30, 1
      %p263 = por %p261, %p262
      %p265 = scmp.ne.s32.totalorder %s250, %s264
      %p266 = scmp.eq.s32.totalorder %s30, 0
      %p267 = por %p265, %p266
      %s269 = sadd.s32 %s268, 1
      %p272 = scmp.eq.s32.totalorder %s24, 1
      %p273 = scmp.ne.s32.totalorder %s268, %s270
      %p274 = scmp.eq.s32.totalorder %s24, 0
      %p275 = por %p273, %p274
      %p276 = scmp.ne.s32.totalorder %s268, %s270
      %p277 = scmp.eq.s32.totalorder %s29, 1
      %p278 = por %p276, %p277
      %p279 = scmp.ne.s32.totalorder %s270, %s271
      %p280 = scmp.eq.s32.totalorder %s29, 0
      %p281 = por %p279, %p280
      %p282 = scmp.ne.s32.totalorder %s270, %s271
      %p283 = scmp.eq.s32.totalorder %s30, 1
      %p284 = por %p282, %p283
      %p286 = scmp.ne.s32.totalorder %s271, %s285
      %p287 = scmp.eq.s32.totalorder %s30, 0
      %p288 = por %p286, %p287
      %s289 = ssub.s32 %s24, %s31
      %p290 = scmp.eq.s32.totalorder %s289, 0
      %s292 = sadd.s32 %s291, 1
      %s293 = scalar_select %p290, %s291, %s292
      %p296 = pneg %p290
      %p297 = scmp.eq.s32.totalorder %s24, 1
      %p298 = por %p296, %p297
      %p299 = scmp.ne.s32.totalorder %s291, %s294
      %p300 = scmp.eq.s32.totalorder %s24, 0
      %p301 = por %p299, %p300
      %p302 = scmp.ne.s32.totalorder %s291, %s294
      %p303 = scmp.eq.s32.totalorder %s29, 1
      %p304 = por %p302, %p303
      %p305 = scmp.ne.s32.totalorder %s294, %s295
      %p306 = scmp.eq.s32.totalorder %s29, 0
      %p307 = por %p305, %p306
      %p308 = scmp.ne.s32.totalorder %s294, %s295
      %p309 = scmp.eq.s32.totalorder %s30, 1
      %p310 = por %p308, %p309
      %p312 = scmp.ne.s32.totalorder %s295, %s311
      %p313 = scmp.eq.s32.totalorder %s30, 0
      %p314 = por %p312, %p313
      %p315 = scmp.le.s32.totalorder 1, %s24
      %p316 = scmp.lt.s32.totalorder %s24, 3
      %p317 = pnand %p315, %p316
      %p318 = pneg %p317
      // Predicated region
      $region9: #{tpu_custom_call.1} parent=5 // pred_check
        _
      $region10: #{tpu_custom_call.1} parent=5 // pred_check_branch
        %320 = sbr.rel (%p317) target = $region12
      $region11: #{tpu_custom_call.1} parent=5 // pred_region
        %s321 = ssub.s32 %s24, 1
        // Predicated region
        $region13: #{tpu_custom_call.1} parent=11 // pred_check
          %p322 = pneg %p71
        $region14: #{tpu_custom_call.1} parent=11 // pred_check_branch
          %324 = sbr.rel (%p322) target = $region16
        $region15: #{tpu_custom_call.1} parent=11 // pred_region
          _
        $region16: #{tpu_custom_call.1} parent=11 // pred_fallthru
          _
        // Predicated region
        $region17: #{tpu_custom_call.1} parent=11 // pred_check
          %p325 = pneg %p92
        $region18: #{tpu_custom_call.1} parent=11 // pred_check_branch
          %327 = sbr.rel (%p325) target = $region20
        $region19: #{tpu_custom_call.1} parent=11 // pred_region
          _
        $region20: #{tpu_custom_call.1} parent=11 // pred_fallthru
          _
        // Predicated region
        $region21: #{tpu_custom_call.1} parent=11 // pred_check
          %p328 = pneg %p113
        $region22: #{tpu_custom_call.1} parent=11 // pred_check_branch
          %330 = sbr.rel (%p328) target = $region24
        $region23: #{tpu_custom_call.1} parent=11 // pred_region
          _
        $region24: #{tpu_custom_call.1} parent=11 // pred_fallthru
          _
        // Predicated region
        $region25: #{tpu_custom_call.1} parent=11 // pred_check
          %p331 = pneg %p134
        $region26: #{tpu_custom_call.1} parent=11 // pred_check_branch
          %333 = sbr.rel (%p331) target = $region28
        $region27: #{tpu_custom_call.1} parent=11 // pred_region
          _
        $region28: #{tpu_custom_call.1} parent=11 // pred_fallthru
          _
        // Predicated region
        $region29: #{tpu_custom_call.1} parent=11 // pred_check
          %p334 = pneg %p155
        $region30: #{tpu_custom_call.1} parent=11 // pred_check_branch
          %336 = sbr.rel (%p334) target = $region32
        $region31: #{tpu_custom_call.1} parent=11 // pred_region
          _
        $region32: #{tpu_custom_call.1} parent=11 // pred_fallthru
          _
        // Predicated region
        $region33: #{tpu_custom_call.1} parent=11 // pred_check
          %p337 = pneg %p176
        $region34: #{tpu_custom_call.1} parent=11 // pred_check_branch
          %339 = sbr.rel (%p337) target = $region36
        $region35: #{tpu_custom_call.1} parent=11 // pred_region
          _
        $region36: #{tpu_custom_call.1} parent=11 // pred_fallthru
          _
        // Predicated region
        $region37: #{tpu_custom_call.1} parent=11 // pred_check
          %p340 = pneg %p197
        $region38: #{tpu_custom_call.1} parent=11 // pred_check_branch
          %342 = sbr.rel (%p340) target = $region40
        $region39: #{tpu_custom_call.1} parent=11 // pred_region
          _
        $region40: #{tpu_custom_call.1} parent=11 // pred_fallthru
          _
        // Predicated region
        $region41: #{tpu_custom_call.1} parent=11 // pred_check
          %p343 = pneg %p218
        $region42: #{tpu_custom_call.1} parent=11 // pred_check_branch
          %345 = sbr.rel (%p343) target = $region44
        $region43: #{tpu_custom_call.1} parent=11 // pred_region
          _
        $region44: #{tpu_custom_call.1} parent=11 // pred_fallthru
          _
        // Predicated region
        $region45: #{tpu_custom_call.1} parent=11 // pred_check
          %p346 = pneg %p239
        $region46: #{tpu_custom_call.1} parent=11 // pred_check_branch
          %348 = sbr.rel (%p346) target = $region48
        $region47: #{tpu_custom_call.1} parent=11 // pred_region
          _
        $region48: #{tpu_custom_call.1} parent=11 // pred_fallthru
          _
        // Predicated region
        $region49: #{tpu_custom_call.1} parent=11 // pred_check
          %p349 = pneg %p260
        $region50: #{tpu_custom_call.1} parent=11 // pred_check_branch
          %351 = sbr.rel (%p349) target = $region52
        $region51: #{tpu_custom_call.1} parent=11 // pred_region
          _
        $region52: #{tpu_custom_call.1} parent=11 // pred_fallthru
          _
        // Predicated region
        $region53: #{tpu_custom_call.1} parent=11 // pred_check
          %p352 = pneg %p281
        $region54: #{tpu_custom_call.1} parent=11 // pred_check_branch
          %354 = sbr.rel (%p352) target = $region56
        $region55: #{tpu_custom_call.1} parent=11 // pred_region
          _
        $region56: #{tpu_custom_call.1} parent=11 // pred_fallthru
          _
      $region12: #{tpu_custom_call.1} parent=5 // pred_fallthru
        _
      %p355 = scmp.lt.s32.totalorder %s24, 2
      // Predicated region
      $region57: #{tpu_custom_call.1} parent=5 // pred_check
        %p356 = pneg %p355
      $region58: #{tpu_custom_call.1} parent=5 // pred_check_branch
        %358 = sbr.rel (%p356) target = $region60
      $region59: #{tpu_custom_call.1} parent=5 // pred_region
        // Predicated region
        $region61: #{tpu_custom_call.1} parent=59 // pred_check
          %p359 = pneg %p44
        $region62: #{tpu_custom_call.1} parent=59 // pred_check_branch
          %361 = sbr.rel (%p359) target = $region64
        $region63: #{tpu_custom_call.1} parent=59 // pred_region
          %s362 = sand.u32 %s34, 1
          %s363 = scalar_lea.sflag [#allocation3], %s362
          %s364 = sand.u32 %s34, 1
          %s365 = smul.addr %s364, 128
          %s366 = scalar_lea.vmem [#allocation2], %s365
          %s367 = smul.u32 4, %s24
          %s369 = ssub.s32 2048, 2048
          %370 = vsyncadd %s363, %s369
          %s371 = smul.addr %s367, 128
          %s372 = scalar_lea.hbm %s0, %s371
          %s373 = sshll.u32 %s366, 4
          %s374 = int_to_ptr.vmem [resolvable:$true] %s373
          %379 = dma.hbm_to_vmem [thread:$0]  %s372, 2048, %s374, %s363, 1024, 512, 32
        $region64: #{tpu_custom_call.1} parent=59 // pred_fallthru
          _
      $region60: #{tpu_custom_call.1} parent=5 // pred_fallthru
        _
      %p380 = scmp.le.s32.totalorder 1, %s24
      %p381 = scmp.lt.s32.totalorder %s24, 3
      %p382 = pnand %p380, %p381
      %p383 = pneg %p382
      // Predicated region
      $region65: #{tpu_custom_call.1} parent=5 // pred_check
        _
      $region66: #{tpu_custom_call.1} parent=5 // pred_check_branch
        %385 = sbr.rel (%p382) target = $region68
      $region67: #{tpu_custom_call.1} parent=5 // pred_region
        %s386 = ssub.s32 %s24, 1
        %s387 = sand.u32 %s37, 1
        %s388 = scalar_lea.sflag [#allocation3], %s387
        %s389 = sand.u32 %s37, 1
        %s390 = smul.addr %s389, 128
        %s391 = scalar_lea.vmem [#allocation2], %s390
        // Predicated region
        $region69: #{tpu_custom_call.1} parent=67 // pred_check
          %p392 = pneg %p50
        $region70: #{tpu_custom_call.1} parent=67 // pred_check_branch
          %394 = sbr.rel (%p392) target = $region72
        $region71: #{tpu_custom_call.1} parent=67 // pred_region
          %395 = dma.done %s388, 2048
        $region72: #{tpu_custom_call.1} parent=67 // pred_fallthru
          _
        %s396 = sand.u32 %s37, 1
        %s397 = scalar_lea.sflag [#allocation3], %s396
        %s398 = sand.u32 %s37, 1
        %s399 = smul.addr %s398, 128
        %s400 = scalar_lea.vmem [#allocation2], %s399
        %p401 = pneg %p50
        %p402 = pneg %p47
        %p403 = pneg %p71
        %p404 = pneg %p68
        %p405 = pneg %p92
        %p406 = pneg %p89
        %p407 = pneg %p113
        %p408 = pneg %p110
        %p409 = pneg %p134
        %p410 = pneg %p131
        %p411 = pneg %p155
        %p412 = pneg %p152
        %p413 = pneg %p176
        %p414 = pneg %p173
        %p415 = pneg %p197
        %p416 = pneg %p194
        %p417 = pneg %p218
        %p418 = pneg %p215
        %p419 = pneg %p239
        %p420 = pneg %p236
        %p421 = pneg %p260
        %p422 = pneg %p257
        %p423 = pneg %p281
        %p424 = pneg %p278
        %p425 = pneg %p307
        %p426 = pneg %p304
        %s427 = sand.u32 %s294, 1
        %s428 = scalar_lea.sflag [#allocation4], %s427
        %s429 = sand.u32 %s294, 1
        %s430 = smul.addr %s429, 128
        %s431 = scalar_lea.vmem [#allocation5], %s430
        %s432 = smul.u32 4, %s29
        %s433 = smul.u32 4, %s29
        %v435 = vld [vmem:[%s391] sm:$0xff]
        %v436 = vld [vmem:[%s391 + $0x8] sm:$0xff]
        %v437 = vld [vmem:[%s391 + $0x10] sm:$0xff]
        %v438 = vld [vmem:[%s391 + $0x18] sm:$0xff]
        %v439 = vld [vmem:[%s391 + $0x20] sm:$0xff]
        %v440 = vld [vmem:[%s391 + $0x28] sm:$0xff]
        %v441 = vld [vmem:[%s391 + $0x30] sm:$0xff]
        %v442 = vld [vmem:[%s391 + $0x38] sm:$0xff]
        %v443 = vld [vmem:[%s391 + $0x40] sm:$0xff]
        %v444 = vld [vmem:[%s391 + $0x48] sm:$0xff]
        %v445 = vld [vmem:[%s391 + $0x50] sm:$0xff]
        %v446 = vld [vmem:[%s391 + $0x58] sm:$0xff]
        %v447 = vld [vmem:[%s391 + $0x60] sm:$0xff]
        %v448 = vld [vmem:[%s391 + $0x68] sm:$0xff]
        %v449 = vld [vmem:[%s391 + $0x70] sm:$0xff]
        %v450 = vld [vmem:[%s391 + $0x78] sm:$0xff]
        %v451 = vld [vmem:[%s1] sm:$0x3f]
        %v452 = vld [vmem:[%s1 + $0x8] sm:$0x3f]
        %v453 = vld [vmem:[%s1 + $0x10] sm:$0x3f]
        %v454 = vld [vmem:[%s1 + $0x18] sm:$0x3f]
        %v455 = vld [vmem:[%s2] sm:$0xf]
        %v456 = vpack.c.bf16 %v439, %v435
        %v457 = vpack.c.bf16 %v440, %v436
        %v458 = vpack.c.bf16 %v441, %v437
        %v459 = vpack.c.bf16 %v442, %v438
        %v460 = vpack.c.bf16 %v447, %v443
        %v461 = vpack.c.bf16 %v448, %v444
        %v462 = vpack.c.bf16 %v449, %v445
        %v463 = vpack.c.bf16 %v450, %v446
        %v464 = vld [vmem:[%s7] sm:$0xff]
        %466 = vset.pattern.permute.xlu0 0
        %467 = vperm.xlu0 %466, %v464
        %v468 = vpop.permute.xlu0 %467
        %vm470 = vcmask 261120
        %v472 = vsel %vm470, %v455, 0
        %474 = vmatprep.subr.bf16.mxu0 %v457
        %475 = vmatpush1.bf16.msra.mxu0 %v456
        %476 = vmatprep.subr.bf16.mxu0 %v461
        %477 = vmatpush1.bf16.msra.mxu0 %v460
        %478 = vmatprep.subr.bf16.mxu0 0
        %479 = vmatpush1.bf16.msra.mxu0 0
        %480 = vmatprep.subr.bf16.mxu0 0
        %481 = vmatpush1.bf16.msra.mxu0 0
        %482 = vmatprep.subr.bf16.mxu0 0
        %483 = vmatpush1.bf16.msra.mxu0 0
        %484 = vmatprep.subr.bf16.mxu0 0
        %485 = vmatpush1.bf16.msra.mxu0 0
        %486 = vmatprep.subr.bf16.mxu0 0
        %487 = vmatpush1.bf16.msra.mxu0 0
        %488 = vmatprep.subr.bf16.mxu0 0
        %489 = vmatpush1.bf16.msra.mxu0 0
        %490 = vmatprep.subr.bf16.mxu0 0
        %491 = vmatpush1.bf16.msra.mxu0 0
        %492 = vmatprep.subr.bf16.mxu0 0
        %493 = vmatpush1.bf16.msra.mxu0 0
        %494 = vmatprep.subr.bf16.mxu0 0
        %495 = vmatpush1.bf16.msra.mxu0 0
        %496 = vmatprep.subr.bf16.mxu0 0
        %497 = vmatpush1.bf16.msra.mxu0 0
        %498 = vmatprep.subr.bf16.mxu0 0
        %499 = vmatpush1.bf16.msra.mxu0 0
        %500 = vmatprep.subr.bf16.mxu0 0
        %501 = vmatpush1.bf16.msra.mxu0 0
        %502 = vmatprep.subr.bf16.mxu0 0
        %503 = vmatpush1.bf16.msra.mxu0 0
        %504 = vmatprep.subr.bf16.mxu0 0
        %505 = vmatpush1.bf16.msra.mxu0 0
        %506 = vmatprep.mubr.bf16.mxu0 0
        %507 = vmatmul.mubr.bf16.gmra.mrb[0].mxu0 %v472
        %v508 = vpop.f32.mrb[0].mxu0
        %v509 = vadd.f32 %v468, %v508
        %v510 = vpop.f32.mrb[0].mxu0
        %v511 = vadd.f32 %v468, %v510
        %v512 = vpop.f32.mrb[0].mxu0
        %v513 = vpop.f32.mrb[0].mxu0
        %514 = vdwg.mxu0
        %515 = vmatprep.subr.bf16.mxu0 %v459
        %516 = vmatpush1.bf16.msra.mxu0 %v458
        %517 = vmatprep.subr.bf16.mxu0 %v463
        %518 = vmatpush1.bf16.msra.mxu0 %v462
        %519 = vmatprep.subr.bf16.mxu0 0
        %520 = vmatpush1.bf16.msra.mxu0 0
        %521 = vmatprep.subr.bf16.mxu0 0
        %522 = vmatpush1.bf16.msra.mxu0 0
        %523 = vmatprep.subr.bf16.mxu0 0
        %524 = vmatpush1.bf16.msra.mxu0 0
        %525 = vmatprep.subr.bf16.mxu0 0
        %526 = vmatpush1.bf16.msra.mxu0 0
        %527 = vmatprep.subr.bf16.mxu0 0
        %528 = vmatpush1.bf16.msra.mxu0 0
        %529 = vmatprep.subr.bf16.mxu0 0
        %530 = vmatpush1.bf16.msra.mxu0 0
        %531 = vmatprep.subr.bf16.mxu0 0
        %532 = vmatpush1.bf16.msra.mxu0 0
        %533 = vmatprep.subr.bf16.mxu0 0
        %534 = vmatpush1.bf16.msra.mxu0 0
        %535 = vmatprep.subr.bf16.mxu0 0
        %536 = vmatpush1.bf16.msra.mxu0 0
        %537 = vmatprep.subr.bf16.mxu0 0
        %538 = vmatpush1.bf16.msra.mxu0 0
        %539 = vmatprep.subr.bf16.mxu0 0
        %540 = vmatpush1.bf16.msra.mxu0 0
        %541 = vmatprep.subr.bf16.mxu0 0
        %542 = vmatpush1.bf16.msra.mxu0 0
        %543 = vmatprep.subr.bf16.mxu0 0
        %544 = vmatpush1.bf16.msra.mxu0 0
        %545 = vmatprep.subr.bf16.mxu0 0
        %546 = vmatpush1.bf16.msra.mxu0 0
        %547 = vmatprep.mubr.bf16.mxu0 0
        %548 = vmatmul.mubr.bf16.gmra.mrb[0].mxu0 %v472
        %v549 = vpop.f32.mrb[0].mxu0
        %v550 = vadd.f32 %v468, %v549
        %v551 = vpop.f32.mrb[0].mxu0
        %v552 = vadd.f32 %v468, %v551
        %v553 = vpop.f32.mrb[0].mxu0
        %v554 = vpop.f32.mrb[0].mxu0
        %555 = vdwg.mxu0
        %v556 = vmax.f32 %v509, 0.0
        %v557 = vmax.f32 %v511, 0.0
        %v558 = vmax.f32 %v550, 0.0
        %v559 = vmax.f32 %v552, 0.0
        %560 = vrot.lane.b32.xlu0 %v556, 1
        %v561 = vpop.permute.xlu0 %560
        %562 = vrot.lane.b32.xlu0 %v557, 1
        %v563 = vpop.permute.xlu0 %562
        %564 = vrot.lane.b32.xlu0 %v558, 1
        %v565 = vpop.permute.xlu0 %564
        %566 = vrot.lane.b32.xlu0 %v559, 1
        %v567 = vpop.permute.xlu0 %566
        %v568 = vlaneseq
        %v569 = vand.u32 %v568, 127
        %vm570 = vcmp.lt.s32.totalorder %v569, 1
        %v571 = vsel %vm570, %v565, %v567
        %v572 = vsel %vm570, %v563, %v565
        %v573 = vsel %vm570, %v561, %v563
        %v574 = vsel %vm570, %v567, %v561
        %v575 = vlaneseq
        %v576 = vshrl.u32 %v575, 7
        %v577 = vsub.s32 0, %v576
        %v578 = vrot.slane %v451, %v577
        %v579 = vlaneseq
        %v580 = vshrl.u32 %v579, 7
        %v581 = vsub.s32 0, %v580
        %v582 = vrot.slane %v452, %v581
        %v583 = vlaneseq
        %v584 = vshrl.u32 %v583, 7
        %v585 = vsub.s32 0, %v584
        %v586 = vrot.slane %v453, %v585
        %v587 = vlaneseq
        %v588 = vshrl.u32 %v587, 7
        %v589 = vsub.s32 0, %v588
        %v590 = vrot.slane %v454, %v589
        %v591 = vmul.f32 %v574, %v578
        %v592 = vmul.f32 %v573, %v582
        %v593 = vmul.f32 %v572, %v586
        %v594 = vmul.f32 %v571, %v590
        %595 = vrot.lane.b32.xlu0 %v556, 127
        %v596 = vpop.permute.xlu0 %595
        %597 = vrot.lane.b32.xlu0 %v557, 127
        %v598 = vpop.permute.xlu0 %597
        %599 = vrot.lane.b32.xlu0 %v558, 127
        %v600 = vpop.permute.xlu0 %599
        %601 = vrot.lane.b32.xlu0 %v559, 127
        %v602 = vpop.permute.xlu0 %601
        %vm603 = vcmp.lt.s32.totalorder %v569, 127
        %v604 = vsel %vm603, %v600, %v602
        %v605 = vsel %vm603, %v598, %v600
        %v606 = vsel %vm603, %v596, %v598
        %v607 = vsel %vm603, %v602, %v596
        %v608 = vlaneseq
        %v609 = vshrl.u32 %v608, 7
        %v610 = vsub.s32 1, %v609
        %v611 = vrot.slane %v451, %v610
        %v612 = vlaneseq
        %v613 = vshrl.u32 %v612, 7
        %v614 = vsub.s32 1, %v613
        %v615 = vrot.slane %v452, %v614
        %v616 = vlaneseq
        %v617 = vshrl.u32 %v616, 7
        %v618 = vsub.s32 1, %v617
        %v619 = vrot.slane %v453, %v618
        %v620 = vlaneseq
        %v621 = vshrl.u32 %v620, 7
        %v622 = vsub.s32 1, %v621
        %v623 = vrot.slane %v454, %v622
        %v624 = vmul.f32 %v606, %v611
        %v625 = vmul.f32 %v605, %v615
        %v626 = vmul.f32 %v604, %v619
        %v627 = vmul.f32 %v607, %v623
        %v628 = vpack.c.bf16 %v556, %v591
        %v629 = vpack.c.bf16 %v557, %v592
        %v630 = vpack.c.bf16 %v558, %v593
        %v631 = vpack.c.bf16 %v559, %v594
        %v632 = vpack.c.bf16 %v624, %v624
        %v633 = vpack.c.bf16 %v625, %v625
        %v634 = vpack.c.bf16 %v626, %v626
        %v635 = vpack.c.bf16 %v627, %v627
        %v636 = vld [vmem:[%s3] sm:$0xf]
        %v637 = vld [vmem:[%s8] sm:$0xff]
        %639 = vset.pattern.permute.xlu0 0
        %640 = vperm.xlu0 %639, %v637
        %v641 = vpop.permute.xlu0 %640
        %vm643 = vcmask 195584
        %v645 = vsel %vm643, %v636, 0
        %vm647 = vcmask 1043456
        %v649 = vsel %vm647, %v632, 0
        %v652 = vsel %vm647, %v633, 0
        %v655 = vsel %vm647, %v634, 0
        %v658 = vsel %vm647, %v635, 0
        %660 = vmatprep.subr.bf16.mxu0 %v629
        %661 = vmatpush1.bf16.msra.mxu0 %v628
        %662 = vmatprep.subr.bf16.mxu0 %v652
        %663 = vmatpush1.bf16.msra.mxu0 %v649
        %664 = vmatprep.subr.bf16.mxu0 0
        %665 = vmatpush1.bf16.msra.mxu0 0
        %666 = vmatprep.subr.bf16.mxu0 0
        %667 = vmatpush1.bf16.msra.mxu0 0
        %668 = vmatprep.subr.bf16.mxu0 0
        %669 = vmatpush1.bf16.msra.mxu0 0
        %670 = vmatprep.subr.bf16.mxu0 0
        %671 = vmatpush1.bf16.msra.mxu0 0
        %672 = vmatprep.subr.bf16.mxu0 0
        %673 = vmatpush1.bf16.msra.mxu0 0
        %674 = vmatprep.subr.bf16.mxu0 0
        %675 = vmatpush1.bf16.msra.mxu0 0
        %676 = vmatprep.subr.bf16.mxu0 0
        %677 = vmatpush1.bf16.msra.mxu0 0
        %678 = vmatprep.subr.bf16.mxu0 0
        %679 = vmatpush1.bf16.msra.mxu0 0
        %680 = vmatprep.subr.bf16.mxu0 0
        %681 = vmatpush1.bf16.msra.mxu0 0
        %682 = vmatprep.subr.bf16.mxu0 0
        %683 = vmatpush1.bf16.msra.mxu0 0
        %684 = vmatprep.subr.bf16.mxu0 0
        %685 = vmatpush1.bf16.msra.mxu0 0
        %686 = vmatprep.subr.bf16.mxu0 0
        %687 = vmatpush1.bf16.msra.mxu0 0
        %688 = vmatprep.subr.bf16.mxu0 0
        %689 = vmatpush1.bf16.msra.mxu0 0
        %690 = vmatprep.subr.bf16.mxu0 0
        %691 = vmatpush1.bf16.msra.mxu0 0
        %692 = vmatprep.mubr.bf16.mxu0 0
        %693 = vmatmul.mubr.bf16.gmra.mrb[0].mxu0 %v645
        %v694 = vpop.f32.mrb[0].mxu0
        %v695 = vadd.f32 %v641, %v694
        %v696 = vpop.f32.mrb[0].mxu0
        %v697 = vadd.f32 %v641, %v696
        %v698 = vpop.f32.mrb[0].mxu0
        %v699 = vpop.f32.mrb[0].mxu0
        %700 = vdwg.mxu0
        %701 = vmatprep.subr.bf16.mxu0 %v631
        %702 = vmatpush1.bf16.msra.mxu0 %v630
        %703 = vmatprep.subr.bf16.mxu0 %v658
        %704 = vmatpush1.bf16.msra.mxu0 %v655
        %705 = vmatprep.subr.bf16.mxu0 0
        %706 = vmatpush1.bf16.msra.mxu0 0
        %707 = vmatprep.subr.bf16.mxu0 0
        %708 = vmatpush1.bf16.msra.mxu0 0
        %709 = vmatprep.subr.bf16.mxu0 0
        %710 = vmatpush1.bf16.msra.mxu0 0
        %711 = vmatprep.subr.bf16.mxu0 0
        %712 = vmatpush1.bf16.msra.mxu0 0
        %713 = vmatprep.subr.bf16.mxu0 0
        %714 = vmatpush1.bf16.msra.mxu0 0
        %715 = vmatprep.subr.bf16.mxu0 0
        %716 = vmatpush1.bf16.msra.mxu0 0
        %717 = vmatprep.subr.bf16.mxu0 0
        %718 = vmatpush1.bf16.msra.mxu0 0
        %719 = vmatprep.subr.bf16.mxu0 0
        %720 = vmatpush1.bf16.msra.mxu0 0
        %721 = vmatprep.subr.bf16.mxu0 0
        %722 = vmatpush1.bf16.msra.mxu0 0
        %723 = vmatprep.subr.bf16.mxu0 0
        %724 = vmatpush1.bf16.msra.mxu0 0
        %725 = vmatprep.subr.bf16.mxu0 0
        %726 = vmatpush1.bf16.msra.mxu0 0
        %727 = vmatprep.subr.bf16.mxu0 0
        %728 = vmatpush1.bf16.msra.mxu0 0
        %729 = vmatprep.subr.bf16.mxu0 0
        %730 = vmatpush1.bf16.msra.mxu0 0
        %731 = vmatprep.subr.bf16.mxu0 0
        %732 = vmatpush1.bf16.msra.mxu0 0
        %733 = vmatprep.mubr.bf16.mxu0 0
        %734 = vmatmul.mubr.bf16.gmra.mrb[0].mxu0 %v645
        %v735 = vpop.f32.mrb[0].mxu0
        %v736 = vadd.f32 %v641, %v735
        %v737 = vpop.f32.mrb[0].mxu0
        %v738 = vadd.f32 %v641, %v737
        %v739 = vpop.f32.mrb[0].mxu0
        %v740 = vpop.f32.mrb[0].mxu0
        %741 = vdwg.mxu0
        %v742 = vmax.f32 %v695, 0.0
        %v743 = vmax.f32 %v697, 0.0
        %v744 = vmax.f32 %v736, 0.0
        %v745 = vmax.f32 %v738, 0.0
        %746 = vrot.lane.b32.xlu0 %v742, 8
        %v747 = vpop.permute.xlu0 %746
        %748 = vrot.lane.b32.xlu0 %v743, 8
        %v749 = vpop.permute.xlu0 %748
        %750 = vrot.lane.b32.xlu0 %v744, 8
        %v751 = vpop.permute.xlu0 %750
        %752 = vrot.lane.b32.xlu0 %v745, 8
        %v753 = vpop.permute.xlu0 %752
        %vm754 = vcmp.lt.s32.totalorder %v569, 8
        %v755 = vsel %vm754, %v751, %v753
        %v756 = vsel %vm754, %v749, %v751
        %v757 = vsel %vm754, %v747, %v749
        %v758 = vsel %vm754, %v753, %v747
        %v759 = vlaneseq
        %v760 = vshrl.u32 %v759, 7
        %v761 = vsub.s32 2, %v760
        %v762 = vrot.slane %v451, %v761
        %v763 = vlaneseq
        %v764 = vshrl.u32 %v763, 7
        %v765 = vsub.s32 2, %v764
        %v766 = vrot.slane %v452, %v765
        %v767 = vlaneseq
        %v768 = vshrl.u32 %v767, 7
        %v769 = vsub.s32 2, %v768
        %v770 = vrot.slane %v453, %v769
        %v771 = vlaneseq
        %v772 = vshrl.u32 %v771, 7
        %v773 = vsub.s32 2, %v772
        %v774 = vrot.slane %v454, %v773
        %v775 = vmul.f32 %v758, %v762
        %v776 = vmul.f32 %v757, %v766
        %v777 = vmul.f32 %v756, %v770
        %v778 = vmul.f32 %v755, %v774
        %779 = vrot.lane.b32.xlu0 %v742, 120
        %v780 = vpop.permute.xlu0 %779
        %781 = vrot.lane.b32.xlu0 %v743, 120
        %v782 = vpop.permute.xlu0 %781
        %783 = vrot.lane.b32.xlu0 %v744, 120
        %v784 = vpop.permute.xlu0 %783
        %785 = vrot.lane.b32.xlu0 %v745, 120
        %v786 = vpop.permute.xlu0 %785
        %vm787 = vcmp.lt.s32.totalorder %v569, 120
        %v788 = vsel %vm787, %v784, %v786
        %v789 = vsel %vm787, %v782, %v784
        %v790 = vsel %vm787, %v780, %v782
        %v791 = vsel %vm787, %v786, %v780
        %v792 = vlaneseq
        %v793 = vshrl.u32 %v792, 7
        %v794 = vsub.s32 3, %v793
        %v795 = vrot.slane %v451, %v794
        %v796 = vlaneseq
        %v797 = vshrl.u32 %v796, 7
        %v798 = vsub.s32 3, %v797
        %v799 = vrot.slane %v452, %v798
        %v800 = vlaneseq
        %v801 = vshrl.u32 %v800, 7
        %v802 = vsub.s32 3, %v801
        %v803 = vrot.slane %v453, %v802
        %v804 = vlaneseq
        %v805 = vshrl.u32 %v804, 7
        %v806 = vsub.s32 3, %v805
        %v807 = vrot.slane %v454, %v806
        %v808 = vmul.f32 %v790, %v795
        %v809 = vmul.f32 %v789, %v799
        %v810 = vmul.f32 %v788, %v803
        %v811 = vmul.f32 %v791, %v807
        %v812 = vpack.c.bf16 %v742, %v775
        %v813 = vpack.c.bf16 %v743, %v776
        %v814 = vpack.c.bf16 %v744, %v777
        %v815 = vpack.c.bf16 %v745, %v778
        %v816 = vpack.c.bf16 %v808, %v808
        %v817 = vpack.c.bf16 %v809, %v809
        %v818 = vpack.c.bf16 %v810, %v810
        %v819 = vpack.c.bf16 %v811, %v811
        %v820 = vld [vmem:[%s4] sm:$0xf]
        %v821 = vld [vmem:[%s9] sm:$0xff]
        %823 = vset.pattern.permute.xlu0 0
        %824 = vperm.xlu0 %823, %v821
        %v825 = vpop.permute.xlu0 %824
        %v828 = vsel %vm643, %v820, 0
        %v831 = vsel %vm647, %v816, 0
        %v834 = vsel %vm647, %v817, 0
        %v837 = vsel %vm647, %v818, 0
        %v840 = vsel %vm647, %v819, 0
        %842 = vmatprep.subr.bf16.mxu0 %v813
        %843 = vmatpush1.bf16.msra.mxu0 %v812
        %844 = vmatprep.subr.bf16.mxu0 %v834
        %845 = vmatpush1.bf16.msra.mxu0 %v831
        %846 = vmatprep.subr.bf16.mxu0 0
        %847 = vmatpush1.bf16.msra.mxu0 0
        %848 = vmatprep.subr.bf16.mxu0 0
        %849 = vmatpush1.bf16.msra.mxu0 0
        %850 = vmatprep.subr.bf16.mxu0 0
        %851 = vmatpush1.bf16.msra.mxu0 0
        %852 = vmatprep.subr.bf16.mxu0 0
        %853 = vmatpush1.bf16.msra.mxu0 0
        %854 = vmatprep.subr.bf16.mxu0 0
        %855 = vmatpush1.bf16.msra.mxu0 0
        %856 = vmatprep.subr.bf16.mxu0 0
        %857 = vmatpush1.bf16.msra.mxu0 0
        %858 = vmatprep.subr.bf16.mxu0 0
        %859 = vmatpush1.bf16.msra.mxu0 0
        %860 = vmatprep.subr.bf16.mxu0 0
        %861 = vmatpush1.bf16.msra.mxu0 0
        %862 = vmatprep.subr.bf16.mxu0 0
        %863 = vmatpush1.bf16.msra.mxu0 0
        %864 = vmatprep.subr.bf16.mxu0 0
        %865 = vmatpush1.bf16.msra.mxu0 0
        %866 = vmatprep.subr.bf16.mxu0 0
        %867 = vmatpush1.bf16.msra.mxu0 0
        %868 = vmatprep.subr.bf16.mxu0 0
        %869 = vmatpush1.bf16.msra.mxu0 0
        %870 = vmatprep.subr.bf16.mxu0 0
        %871 = vmatpush1.bf16.msra.mxu0 0
        %872 = vmatprep.subr.bf16.mxu0 0
        %873 = vmatpush1.bf16.msra.mxu0 0
        %874 = vmatprep.mubr.bf16.mxu0 0
        %875 = vmatmul.mubr.bf16.gmra.mrb[0].mxu0 %v828
        %v876 = vpop.f32.mrb[0].mxu0
        %v877 = vadd.f32 %v825, %v876
        %v878 = vpop.f32.mrb[0].mxu0
        %v879 = vadd.f32 %v825, %v878
        %v880 = vpop.f32.mrb[0].mxu0
        %v881 = vpop.f32.mrb[0].mxu0
        %882 = vdwg.mxu0
        %883 = vmatprep.subr.bf16.mxu0 %v815
        %884 = vmatpush1.bf16.msra.mxu0 %v814
        %885 = vmatprep.subr.bf16.mxu0 %v840
        %886 = vmatpush1.bf16.msra.mxu0 %v837
        %887 = vmatprep.subr.bf16.mxu0 0
        %888 = vmatpush1.bf16.msra.mxu0 0
        %889 = vmatprep.subr.bf16.mxu0 0
        %890 = vmatpush1.bf16.msra.mxu0 0
        %891 = vmatprep.subr.bf16.mxu0 0
        %892 = vmatpush1.bf16.msra.mxu0 0
        %893 = vmatprep.subr.bf16.mxu0 0
        %894 = vmatpush1.bf16.msra.mxu0 0
        %895 = vmatprep.subr.bf16.mxu0 0
        %896 = vmatpush1.bf16.msra.mxu0 0
        %897 = vmatprep.subr.bf16.mxu0 0
        %898 = vmatpush1.bf16.msra.mxu0 0
        %899 = vmatprep.subr.bf16.mxu0 0
        %900 = vmatpush1.bf16.msra.mxu0 0
        %901 = vmatprep.subr.bf16.mxu0 0
        %902 = vmatpush1.bf16.msra.mxu0 0
        %903 = vmatprep.subr.bf16.mxu0 0
        %904 = vmatpush1.bf16.msra.mxu0 0
        %905 = vmatprep.subr.bf16.mxu0 0
        %906 = vmatpush1.bf16.msra.mxu0 0
        %907 = vmatprep.subr.bf16.mxu0 0
        %908 = vmatpush1.bf16.msra.mxu0 0
        %909 = vmatprep.subr.bf16.mxu0 0
        %910 = vmatpush1.bf16.msra.mxu0 0
        %911 = vmatprep.subr.bf16.mxu0 0
        %912 = vmatpush1.bf16.msra.mxu0 0
        %913 = vmatprep.subr.bf16.mxu0 0
        %914 = vmatpush1.bf16.msra.mxu0 0
        %915 = vmatprep.mubr.bf16.mxu0 0
        %916 = vmatmul.mubr.bf16.gmra.mrb[0].mxu0 %v828
        %v917 = vpop.f32.mrb[0].mxu0
        %v918 = vadd.f32 %v825, %v917
        %v919 = vpop.f32.mrb[0].mxu0
        %v920 = vadd.f32 %v825, %v919
        %v921 = vpop.f32.mrb[0].mxu0
        %v922 = vpop.f32.mrb[0].mxu0
        %923 = vdwg.mxu0
        %v924 = vadd.f32 %v877, %v695
        %v925 = vadd.f32 %v879, %v697
        %v926 = vadd.f32 %v918, %v736
        %v927 = vadd.f32 %v920, %v738
        %v928 = vmax.f32 %v924, 0.0
        %v929 = vmax.f32 %v925, 0.0
        %v930 = vmax.f32 %v926, 0.0
        %v931 = vmax.f32 %v927, 0.0
        %932 = vrot.lane.b32.xlu0 %v928, 64
        %v933 = vpop.permute.xlu0 %932
        %934 = vrot.lane.b32.xlu0 %v929, 64
        %v935 = vpop.permute.xlu0 %934
        %936 = vrot.lane.b32.xlu0 %v930, 64
        %v937 = vpop.permute.xlu0 %936
        %938 = vrot.lane.b32.xlu0 %v931, 64
        %v939 = vpop.permute.xlu0 %938
        %vm940 = vcmp.lt.s32.totalorder %v569, 64
        %v941 = vsel %vm940, %v937, %v939
        %v942 = vsel %vm940, %v935, %v937
        %v943 = vsel %vm940, %v933, %v935
        %v944 = vsel %vm940, %v939, %v933
        %v945 = vlaneseq
        %v946 = vshrl.u32 %v945, 7
        %v947 = vsub.s32 4, %v946
        %v948 = vrot.slane %v451, %v947
        %v949 = vlaneseq
        %v950 = vshrl.u32 %v949, 7
        %v951 = vsub.s32 4, %v950
        %v952 = vrot.slane %v452, %v951
        %v953 = vlaneseq
        %v954 = vshrl.u32 %v953, 7
        %v955 = vsub.s32 4, %v954
        %v956 = vrot.slane %v453, %v955
        %v957 = vlaneseq
        %v958 = vshrl.u32 %v957, 7
        %v959 = vsub.s32 4, %v958
        %v960 = vrot.slane %v454, %v959
        %v961 = vmul.f32 %v944, %v948
        %v962 = vmul.f32 %v943, %v952
        %v963 = vmul.f32 %v942, %v956
        %v964 = vmul.f32 %v941, %v960
        %v965 = vlaneseq
        %v966 = vshrl.u32 %v965, 7
        %v967 = vsub.s32 5, %v966
        %v968 = vrot.slane %v451, %v967
        %v969 = vlaneseq
        %v970 = vshrl.u32 %v969, 7
        %v971 = vsub.s32 5, %v970
        %v972 = vrot.slane %v452, %v971
        %v973 = vlaneseq
        %v974 = vshrl.u32 %v973, 7
        %v975 = vsub.s32 5, %v974
        %v976 = vrot.slane %v453, %v975
        %v977 = vlaneseq
        %v978 = vshrl.u32 %v977, 7
        %v979 = vsub.s32 5, %v978
        %v980 = vrot.slane %v454, %v979
        %v981 = vmul.f32 %v943, %v968
        %v982 = vmul.f32 %v942, %v972
        %v983 = vmul.f32 %v941, %v976
        %v984 = vmul.f32 %v944, %v980
        %v985 = vpack.c.bf16 %v928, %v961
        %v986 = vpack.c.bf16 %v929, %v962
        %v987 = vpack.c.bf16 %v930, %v963
        %v988 = vpack.c.bf16 %v931, %v964
        %v989 = vpack.c.bf16 %v981, %v981
        %v990 = vpack.c.bf16 %v982, %v982
        %v991 = vpack.c.bf16 %v983, %v983
        %v992 = vpack.c.bf16 %v984, %v984
        %v993 = vld [vmem:[%s5] sm:$0xf]
        %v994 = vld [vmem:[%s10] sm:$0xff]
        %996 = vset.pattern.permute.xlu0 0
        %997 = vperm.xlu0 %996, %v994
        %v998 = vpop.permute.xlu0 %997
        %v1001 = vsel %vm643, %v993, 0
        %v1004 = vsel %vm647, %v989, 0
        %v1007 = vsel %vm647, %v990, 0
        %v1010 = vsel %vm647, %v991, 0
        %v1013 = vsel %vm647, %v992, 0
        %1015 = vmatprep.subr.bf16.mxu0 %v986
        %1016 = vmatpush1.bf16.msra.mxu0 %v985
        %1017 = vmatprep.subr.bf16.mxu0 %v1007
        %1018 = vmatpush1.bf16.msra.mxu0 %v1004
        %1019 = vmatprep.subr.bf16.mxu0 0
        %1020 = vmatpush1.bf16.msra.mxu0 0
        %1021 = vmatprep.subr.bf16.mxu0 0
        %1022 = vmatpush1.bf16.msra.mxu0 0
        %1023 = vmatprep.subr.bf16.mxu0 0
        %1024 = vmatpush1.bf16.msra.mxu0 0
        %1025 = vmatprep.subr.bf16.mxu0 0
        %1026 = vmatpush1.bf16.msra.mxu0 0
        %1027 = vmatprep.subr.bf16.mxu0 0
        %1028 = vmatpush1.bf16.msra.mxu0 0
        %1029 = vmatprep.subr.bf16.mxu0 0
        %1030 = vmatpush1.bf16.msra.mxu0 0
        %1031 = vmatprep.subr.bf16.mxu0 0
        %1032 = vmatpush1.bf16.msra.mxu0 0
        %1033 = vmatprep.subr.bf16.mxu0 0
        %1034 = vmatpush1.bf16.msra.mxu0 0
        %1035 = vmatprep.subr.bf16.mxu0 0
        %1036 = vmatpush1.bf16.msra.mxu0 0
        %1037 = vmatprep.subr.bf16.mxu0 0
        %1038 = vmatpush1.bf16.msra.mxu0 0
        %1039 = vmatprep.subr.bf16.mxu0 0
        %1040 = vmatpush1.bf16.msra.mxu0 0
        %1041 = vmatprep.subr.bf16.mxu0 0
        %1042 = vmatpush1.bf16.msra.mxu0 0
        %1043 = vmatprep.subr.bf16.mxu0 0
        %1044 = vmatpush1.bf16.msra.mxu0 0
        %1045 = vmatprep.subr.bf16.mxu0 0
        %1046 = vmatpush1.bf16.msra.mxu0 0
        %1047 = vmatprep.mubr.bf16.mxu0 0
        %1048 = vmatmul.mubr.bf16.gmra.mrb[0].mxu0 %v1001
        %v1049 = vpop.f32.mrb[0].mxu0
        %v1050 = vadd.f32 %v998, %v1049
        %v1051 = vpop.f32.mrb[0].mxu0
        %v1052 = vadd.f32 %v998, %v1051
        %v1053 = vpop.f32.mrb[0].mxu0
        %v1054 = vpop.f32.mrb[0].mxu0
        %1055 = vdwg.mxu0
        %1056 = vmatprep.subr.bf16.mxu0 %v988
        %1057 = vmatpush1.bf16.msra.mxu0 %v987
        %1058 = vmatprep.subr.bf16.mxu0 %v1013
        %1059 = vmatpush1.bf16.msra.mxu0 %v1010
        %1060 = vmatprep.subr.bf16.mxu0 0
        %1061 = vmatpush1.bf16.msra.mxu0 0
        %1062 = vmatprep.subr.bf16.mxu0 0
        %1063 = vmatpush1.bf16.msra.mxu0 0
        %1064 = vmatprep.subr.bf16.mxu0 0
        %1065 = vmatpush1.bf16.msra.mxu0 0
        %1066 = vmatprep.subr.bf16.mxu0 0
        %1067 = vmatpush1.bf16.msra.mxu0 0
        %1068 = vmatprep.subr.bf16.mxu0 0
        %1069 = vmatpush1.bf16.msra.mxu0 0
        %1070 = vmatprep.subr.bf16.mxu0 0
        %1071 = vmatpush1.bf16.msra.mxu0 0
        %1072 = vmatprep.subr.bf16.mxu0 0
        %1073 = vmatpush1.bf16.msra.mxu0 0
        %1074 = vmatprep.subr.bf16.mxu0 0
        %1075 = vmatpush1.bf16.msra.mxu0 0
        %1076 = vmatprep.subr.bf16.mxu0 0
        %1077 = vmatpush1.bf16.msra.mxu0 0
        %1078 = vmatprep.subr.bf16.mxu0 0
        %1079 = vmatpush1.bf16.msra.mxu0 0
        %1080 = vmatprep.subr.bf16.mxu0 0
        %1081 = vmatpush1.bf16.msra.mxu0 0
        %1082 = vmatprep.subr.bf16.mxu0 0
        %1083 = vmatpush1.bf16.msra.mxu0 0
        %1084 = vmatprep.subr.bf16.mxu0 0
        %1085 = vmatpush1.bf16.msra.mxu0 0
        %1086 = vmatprep.subr.bf16.mxu0 0
        %1087 = vmatpush1.bf16.msra.mxu0 0
        %1088 = vmatprep.mubr.bf16.mxu0 0
        %1089 = vmatmul.mubr.bf16.gmra.mrb[0].mxu0 %v1001
        %v1090 = vpop.f32.mrb[0].mxu0
        %v1091 = vadd.f32 %v998, %v1090
        %v1092 = vpop.f32.mrb[0].mxu0
        %v1093 = vadd.f32 %v998, %v1092
        %v1094 = vpop.f32.mrb[0].mxu0
        %v1095 = vpop.f32.mrb[0].mxu0
        %1096 = vdwg.mxu0
        %v1097 = vadd.f32 %v1050, %v695
        %v1098 = vadd.f32 %v1052, %v697
        %v1099 = vadd.f32 %v1091, %v736
        %v1100 = vadd.f32 %v1093, %v738
        %v1101 = vadd.f32 %v1097, %v924
        %v1102 = vadd.f32 %v1098, %v925
        %v1103 = vadd.f32 %v1099, %v926
        %v1104 = vadd.f32 %v1100, %v927
        %v1105 = vmax.f32 %v1101, 0.0
        %v1106 = vmax.f32 %v1102, 0.0
        %v1107 = vmax.f32 %v1103, 0.0
        %v1108 = vmax.f32 %v1104, 0.0
        %v1109 = vld [vmem:[%s6] sm:$0xf]
        %v1110 = vld [vmem:[%s6 + $0x4] sm:$0xf]
        %v1111 = vld [vmem:[%s6 + $0x8] sm:$0xf]
        %v1112 = vld [vmem:[%s6 + $0xc] sm:$0xf]
        %v1113 = vpack.c.bf16 %v1105, %v1105
        %v1114 = vpack.c.bf16 %v1106, %v1106
        %v1115 = vpack.c.bf16 %v1107, %v1107
        %v1116 = vpack.c.bf16 %v1108, %v1108
        %v1117 = vld [vmem:[%s11] sm:$0xff]
        %v1118 = vld [vmem:[%s11 + $0x8] sm:$0xff]
        %v1119 = vld [vmem:[%s11 + $0x10] sm:$0xff]
        %v1120 = vld [vmem:[%s11 + $0x18] sm:$0xff]
        %1122 = vset.pattern.permute.xlu0 0
        %1123 = vperm.xlu0 %1122, %v1117
        %v1124 = vpop.permute.xlu0 %1123
        %1127 = vset.pattern.permute.xlu0 0
        %1128 = vperm.xlu0 %1127, %v1118
        %v1129 = vpop.permute.xlu0 %1128
        %1132 = vset.pattern.permute.xlu0 0
        %1133 = vperm.xlu0 %1132, %v1119
        %v1134 = vpop.permute.xlu0 %1133
        %1137 = vset.pattern.permute.xlu0 0
        %1138 = vperm.xlu0 %1137, %v1120
        %v1139 = vpop.permute.xlu0 %1138
        %v1145 = vunpack.c.l.b16 %v1109
        %v1146 = vunpack.c.l.b16 %v1110
        %v1147 = vunpack.c.l.b16 %v1111
        %v1148 = vunpack.c.l.b16 %v1112
        %v1149 = vpack.c.b16 %v1146, %v1145
        %v1150 = vpack.c.b16 %v1148, %v1147
        %vm1151 = vcmask 64512
        %v1153 = vsel %vm1151, %v1149, 0
        %v1156 = vsel %vm1151, %v1150, 0
        %v1159 = vsel %vm647, %v1113, 0
        %v1162 = vsel %vm647, %v1114, 0
        %v1165 = vsel %vm647, %v1115, 0
        %v1168 = vsel %vm647, %v1116, 0
        %1170 = vmatprep.subr.bf16.mxu0 %v1162
        %1171 = vmatpush1.bf16.msra.mxu0 %v1159
        %1172 = vmatprep.subr.bf16.mxu0 0
        %1173 = vmatpush1.bf16.msra.mxu0 0
        %1174 = vmatprep.subr.bf16.mxu0 0
        %1175 = vmatpush1.bf16.msra.mxu0 0
        %1176 = vmatprep.subr.bf16.mxu0 0
        %1177 = vmatpush1.bf16.msra.mxu0 0
        %1178 = vmatprep.subr.bf16.mxu0 0
        %1179 = vmatpush1.bf16.msra.mxu0 0
        %1180 = vmatprep.subr.bf16.mxu0 0
        %1181 = vmatpush1.bf16.msra.mxu0 0
        %1182 = vmatprep.subr.bf16.mxu0 0
        %1183 = vmatpush1.bf16.msra.mxu0 0
        %1184 = vmatprep.subr.bf16.mxu0 0
        %1185 = vmatpush1.bf16.msra.mxu0 0
        %1186 = vmatprep.subr.bf16.mxu0 0
        %1187 = vmatpush1.bf16.msra.mxu0 0
        %1188 = vmatprep.subr.bf16.mxu0 0
        %1189 = vmatpush1.bf16.msra.mxu0 0
        %1190 = vmatprep.subr.bf16.mxu0 0
        %1191 = vmatpush1.bf16.msra.mxu0 0
        %1192 = vmatprep.subr.bf16.mxu0 0
        %1193 = vmatpush1.bf16.msra.mxu0 0
        %1194 = vmatprep.subr.bf16.mxu0 0
        %1195 = vmatpush1.bf16.msra.mxu0 0
        %1196 = vmatprep.subr.bf16.mxu0 0
        %1197 = vmatpush1.bf16.msra.mxu0 0
        %1198 = vmatprep.subr.bf16.mxu0 0
        %1199 = vmatpush1.bf16.msra.mxu0 0
        %1200 = vmatprep.subr.bf16.mxu0 0
        %1201 = vmatpush1.bf16.msra.mxu0 0
        %1202 = vmatprep.mubr.bf16.mxu0 0
        %1203 = vmatmul.mubr.bf16.gmra.mrb[0].mxu0 %v1153
        %v1204 = vpop.f32.mrb[0].mxu0
        %v1205 = vadd.f32 %v1124, %v1204
        %v1206 = vpop.f32.mrb[0].mxu0
        %v1207 = vadd.f32 %v1124, %v1206
        %v1208 = vpop.f32.mrb[0].mxu0
        %v1209 = vadd.f32 %v1129, %v1208
        %v1210 = vpop.f32.mrb[0].mxu0
        %v1211 = vadd.f32 %v1129, %v1210
        %1212 = vmatprep.mubr.bf16.mxu0 0
        %1213 = vmatmul.mubr.bf16.gmra.mrb[0].mxu0 %v1156
        %v1214 = vpop.f32.mrb[0].mxu0
        %v1215 = vadd.f32 %v1134, %v1214
        %v1216 = vpop.f32.mrb[0].mxu0
        %v1217 = vadd.f32 %v1134, %v1216
        %v1218 = vpop.f32.mrb[0].mxu0
        %v1219 = vadd.f32 %v1139, %v1218
        %v1220 = vpop.f32.mrb[0].mxu0
        %v1221 = vadd.f32 %v1139, %v1220
        %1222 = vdwg.mxu0
        %1223 = vmatprep.subr.bf16.mxu0 %v1168
        %1224 = vmatpush1.bf16.msra.mxu0 %v1165
        %1225 = vmatprep.subr.bf16.mxu0 0
        %1226 = vmatpush1.bf16.msra.mxu0 0
        %1227 = vmatprep.subr.bf16.mxu0 0
        %1228 = vmatpush1.bf16.msra.mxu0 0
        %1229 = vmatprep.subr.bf16.mxu0 0
        %1230 = vmatpush1.bf16.msra.mxu0 0
        %1231 = vmatprep.subr.bf16.mxu0 0
        %1232 = vmatpush1.bf16.msra.mxu0 0
        %1233 = vmatprep.subr.bf16.mxu0 0
        %1234 = vmatpush1.bf16.msra.mxu0 0
        %1235 = vmatprep.subr.bf16.mxu0 0
        %1236 = vmatpush1.bf16.msra.mxu0 0
        %1237 = vmatprep.subr.bf16.mxu0 0
        %1238 = vmatpush1.bf16.msra.mxu0 0
        %1239 = vmatprep.subr.bf16.mxu0 0
        %1240 = vmatpush1.bf16.msra.mxu0 0
        %1241 = vmatprep.subr.bf16.mxu0 0
        %1242 = vmatpush1.bf16.msra.mxu0 0
        %1243 = vmatprep.subr.bf16.mxu0 0
        %1244 = vmatpush1.bf16.msra.mxu0 0
        %1245 = vmatprep.subr.bf16.mxu0 0
        %1246 = vmatpush1.bf16.msra.mxu0 0
        %1247 = vmatprep.subr.bf16.mxu0 0
        %1248 = vmatpush1.bf16.msra.mxu0 0
        %1249 = vmatprep.subr.bf16.mxu0 0
        %1250 = vmatpush1.bf16.msra.mxu0 0
        %1251 = vmatprep.subr.bf16.mxu0 0
        %1252 = vmatpush1.bf16.msra.mxu0 0
        %1253 = vmatprep.subr.bf16.mxu0 0
        %1254 = vmatpush1.bf16.msra.mxu0 0
        %1255 = vmatprep.mubr.bf16.mxu0 0
        %1256 = vmatmul.mubr.bf16.gmra.mrb[0].mxu0 %v1153
        %v1257 = vpop.f32.mrb[0].mxu0
        %v1258 = vadd.f32 %v1124, %v1257
        %v1259 = vpop.f32.mrb[0].mxu0
        %v1260 = vadd.f32 %v1124, %v1259
        %v1261 = vpop.f32.mrb[0].mxu0
        %v1262 = vadd.f32 %v1129, %v1261
        %v1263 = vpop.f32.mrb[0].mxu0
        %v1264 = vadd.f32 %v1129, %v1263
        %1265 = vmatprep.mubr.bf16.mxu0 0
        %1266 = vmatmul.mubr.bf16.gmra.mrb[0].mxu0 %v1156
        %v1267 = vpop.f32.mrb[0].mxu0
        %v1268 = vadd.f32 %v1134, %v1267
        %v1269 = vpop.f32.mrb[0].mxu0
        %v1270 = vadd.f32 %v1134, %v1269
        %v1271 = vpop.f32.mrb[0].mxu0
        %v1272 = vadd.f32 %v1139, %v1271
        %v1273 = vpop.f32.mrb[0].mxu0
        %v1274 = vadd.f32 %v1139, %v1273
        %1275 = vdwg.mxu0
        %v1276 = vadd.f32 %v1205, %v435
        %v1277 = vadd.f32 %v1207, %v436
        %v1278 = vadd.f32 %v1258, %v437
        %v1279 = vadd.f32 %v1260, %v438
        %v1280 = vadd.f32 %v1209, %v439
        %v1281 = vadd.f32 %v1211, %v440
        %v1282 = vadd.f32 %v1262, %v441
        %v1283 = vadd.f32 %v1264, %v442
        %v1284 = vadd.f32 %v1215, %v443
        %v1285 = vadd.f32 %v1217, %v444
        %v1286 = vadd.f32 %v1268, %v445
        %v1287 = vadd.f32 %v1270, %v446
        %v1288 = vadd.f32 %v1219, %v447
        %v1289 = vadd.f32 %v1221, %v448
        %v1290 = vadd.f32 %v1272, %v449
        %v1291 = vadd.f32 %v1274, %v450
        %v1292 = vmax.f32 %v1276, 0.0
        %v1293 = vmax.f32 %v1277, 0.0
        %v1294 = vmax.f32 %v1278, 0.0
        %v1295 = vmax.f32 %v1279, 0.0
        %v1296 = vmax.f32 %v1280, 0.0
        %v1297 = vmax.f32 %v1281, 0.0
        %v1298 = vmax.f32 %v1282, 0.0
        %v1299 = vmax.f32 %v1283, 0.0
        %v1300 = vmax.f32 %v1284, 0.0
        %v1301 = vmax.f32 %v1285, 0.0
        %v1302 = vmax.f32 %v1286, 0.0
        %v1303 = vmax.f32 %v1287, 0.0
        %v1304 = vmax.f32 %v1288, 0.0
        %v1305 = vmax.f32 %v1289, 0.0
        %v1306 = vmax.f32 %v1290, 0.0
        %v1307 = vmax.f32 %v1291, 0.0
        %1308 = vst [vmem:[%s431] sm:$0xff] %v1292
        %1309 = vst [vmem:[%s431 + $0x8] sm:$0xff] %v1293
        %1310 = vst [vmem:[%s431 + $0x10] sm:$0xff] %v1294
        %1311 = vst [vmem:[%s431 + $0x18] sm:$0xff] %v1295
        %1312 = vst [vmem:[%s431 + $0x20] sm:$0xff] %v1296
        %1313 = vst [vmem:[%s431 + $0x28] sm:$0xff] %v1297
        %1314 = vst [vmem:[%s431 + $0x30] sm:$0xff] %v1298
        %1315 = vst [vmem:[%s431 + $0x38] sm:$0xff] %v1299
        %1316 = vst [vmem:[%s431 + $0x40] sm:$0xff] %v1300
        %1317 = vst [vmem:[%s431 + $0x48] sm:$0xff] %v1301
        %1318 = vst [vmem:[%s431 + $0x50] sm:$0xff] %v1302
        %1319 = vst [vmem:[%s431 + $0x58] sm:$0xff] %v1303
        %1320 = vst [vmem:[%s431 + $0x60] sm:$0xff] %v1304
        %1321 = vst [vmem:[%s431 + $0x68] sm:$0xff] %v1305
        %1322 = vst [vmem:[%s431 + $0x70] sm:$0xff] %v1306
        %1323 = vst [vmem:[%s431 + $0x78] sm:$0xff] %v1307
        %s1324 = sand.u32 %s294, 1
        %s1325 = scalar_lea.sflag [#allocation4], %s1324
        %s1326 = sand.u32 %s294, 1
        %s1327 = smul.addr %s1326, 128
        %s1328 = scalar_lea.vmem [#allocation5], %s1327
        // Predicated region
        $region73: #{tpu_custom_call.1} parent=67 // pred_check
          %p1329 = pneg %p304
        $region74: #{tpu_custom_call.1} parent=67 // pred_check_branch
          %1331 = sbr.rel (%p1329) target = $region76
        $region75: #{tpu_custom_call.1} parent=67 // pred_region
          %s1332 = smul.u32 4, %s29
          %s1334 = ssub.s32 2048, 2048
          %1335 = vsyncadd %s1325, %s1334
          %s1336 = smul.addr %s1332, 128
          %s1337 = scalar_lea.hbm %s12, %s1336
          %s1338 = sshll.u32 %s1328, 4
          %s1339 = int_to_ptr.vmem [resolvable:$true] %s1338
          %1344 = dma.vmem_to_hbm [thread:$0]  %s1339, 2048, %s1337, %s1325, 512, 1024, 32
        $region76: #{tpu_custom_call.1} parent=67 // pred_fallthru
          _
      $region68: #{tpu_custom_call.1} parent=5 // pred_fallthru
        _
      %p1345 = scmp.le.s32.totalorder 2, %s24
      // Predicated region
      $region77: #{tpu_custom_call.1} parent=5 // pred_check
        %p1346 = pneg %p1345
      $region78: #{tpu_custom_call.1} parent=5 // pred_check_branch
        %1348 = sbr.rel (%p1346) target = $region80
      $region79: #{tpu_custom_call.1} parent=5 // pred_region
        %s1349 = ssub.s32 %s24, 2
        // Predicated region
        $region81: #{tpu_custom_call.1} parent=79 // pred_check
          %p1350 = pneg %p310
        $region82: #{tpu_custom_call.1} parent=79 // pred_check_branch
          %1352 = sbr.rel (%p1350) target = $region84
        $region83: #{tpu_custom_call.1} parent=79 // pred_region
          %s1353 = sand.u32 %s295, 1
          %s1354 = scalar_lea.sflag [#allocation4], %s1353
          %s1355 = sand.u32 %s295, 1
          %s1356 = smul.addr %s1355, 128
          %s1357 = scalar_lea.vmem [#allocation5], %s1356
          %1358 = dma.done %s1354, 2048
        $region84: #{tpu_custom_call.1} parent=79 // pred_fallthru
          _
      $region80: #{tpu_custom_call.1} parent=5 // pred_fallthru
        _
    $region6: #{tpu_custom_call.1} parent=1 // loop_footer
      %s28 = sadd.s32 1, %s24
    $region7: #{tpu_custom_call.1} parent=1 // loop_footer_branch
      %23 = sbr.rel target = $region3
    $region8: #{tpu_custom_call.1} parent=1 // loop_exit
      _
    %1359 = vsyncpa [#allocation3], 1
    %s1360 = scalar_lea.sflag [#allocation3], 1
    %1361 = vsyncpa %s1360, 1
    %1362 = vsyncpa [#allocation4], 1
    %s1363 = scalar_lea.sflag [#allocation4], 1
    %1364 = vsyncpa %s1363, 1

</llo_original>
